<compile_context>
chip_gen: v6e
topology: v6e:2x2x1
jax: 0.10.0
libtpu: 0.0.40
codegen_flags: <defaults>
</compile_context>

<pallas_src>
import functools

import jax
import jax.numpy as jnp
from jax.experimental import pallas as pl
from jax.experimental.pallas import tpu as pltpu

NUM_CLASSES = 9
LOSS_WEIGHT = 1.0
SMOOTH = 1.0
COS_EPS = 1e-8                         # F.cosine_similarity default eps


def _vmem_budgets():
    """Generation-aware scoped-VMEM limit and per-tile budget.

    v5e/v6e: 128 MiB VMEM -> ~96 MiB limit / 48 MiB tile budget.
    v7x:      64 MiB VMEM -> ~48 MiB limit / 24 MiB tile budget.
    Falls back to the conservative (v7x) numbers if the query is unavailable.
    """
    cap = None
    try:
        cap = getattr(pltpu.get_tpu_info(), "vmem_capacity_bytes", None)
    except Exception:
        cap = None
    if not cap:
        cap = 64 * 1024 * 1024
    limit = (3 * cap) // 4
    return limit, limit // 2


_VMEM_LIMIT, _TILE_BUDGET = _vmem_budgets()


def _region_sum_kernel(s_ref, t_ref, lab_ref, rst_ref, cnt_ref, *,
                       tiles_per_split, n_total, needs_mask):
    """Accumulate per-class region sums over spatial tiles.

    s_ref, t_ref : (1, C, TN)        student / teacher feature tiles (native dtype)
    lab_ref      : (1, 1, TN) int8   class labels for the same voxels
    rst_ref      : (1, K_PAD, 2C) f32  [student | teacher] region sums
    cnt_ref      : (1, K_PAD, 1)  f32  per-class voxel counts
    """
    @pl.when(pl.program_id(2) == 0)
    def _():
        rst_ref[...] = jnp.zeros_like(rst_ref)
        cnt_ref[...] = jnp.zeros_like(cnt_ref)

    k_pad = rst_ref.shape[1]
    tn = s_ref.shape[2]

    s = s_ref[0]                                    # (C, TN)
    t = t_ref[0]                                    # (C, TN)
    lab = lab_ref[0].astype(jnp.int32)              # (1, TN)

    # One-hot built in-kernel, lane-dense: classes on sublanes, N on lanes.
    class_ids = jax.lax.broadcasted_iota(jnp.int32, (k_pad, tn), 0)
    mask = class_ids == lab                         # (K_PAD, TN) bool

    if needs_mask:
        # Tail tile (N % TN != 0) and/or the duplicated tile introduced by the
        # N-split: zero every lane whose global voxel index is >= N.  Features
        # are zeroed with a select so OOB garbage (possibly NaN/Inf) never
        # reaches the MXU accumulation.
        tile_idx = pl.program_id(1) * tiles_per_split + pl.program_id(2)
        lane = jax.lax.broadcasted_iota(jnp.int32, (1, tn), 1)
        valid = (tile_idx * tn + lane) < n_total    # (1, TN)
        mask = jnp.logical_and(mask, valid)
        s = jnp.where(valid, s, 0)
        t = jnp.where(valid, t, 0)

    onehot = mask.astype(s.dtype)                   # (K_PAD, TN)
    st = jnp.concatenate([s, t], axis=0)            # (2C, TN), VMEM-local copy

    # Single MXU contraction over the lane (N) axis for student AND teacher.
    dn = (((1,), (1,)), ((), ()))
    rst_ref[0] += jax.lax.dot_general(onehot, st, dn,
                                      preferred_element_type=jnp.float32)
    # Voxel counts: exact int32 lane reduction (XLU) — no third matmul.
    cnt_ref[0] += jnp.sum(mask.astype(jnp.int32), axis=1,
                          keepdims=True).astype(jnp.float32)


def _pair_loss_kernel(rs_ref, rt_ref, cnt_ref, out_ref, *, num_classes):
    """Pairwise region-affinity distillation loss from the region sums.

    rs_ref, rt_ref: (B, K_PAD, C) f32 region sums
    cnt_ref       : (B, K_PAD, 1) f32 per-class voxel counts
    out_ref       : (1, 1) f32 scalar loss
    """
    rs = rs_ref[...]
    rt = rt_ref[...]
    cnt = cnt_ref[...]
    k_pad = rs.shape[1]

    def cosine_matrix(region):
        # region0 (pair index i): divide by the raw count; region1 (pair index j):
        # divide by count + SMOOTH -- exactly as in the PyTorch reference.
        r0 = region / cnt
        r1 = region / (cnt + SMOOTH)
        # F.cosine_similarity semantics: clamp each norm to eps independently.
        n0 = jnp.maximum(jnp.sqrt(jnp.sum(r0 * r0, axis=-1, keepdims=True)), COS_EPS)
        n1 = jnp.maximum(jnp.sqrt(jnp.sum(r1 * r1, axis=-1, keepdims=True)), COS_EPS)
        r0 = r0 / n0
        r1 = r1 / n1
        # cos[b, i, j] = <r0[b, i], r1[b, j]>  -- one small batched MXU matmul.
        return jnp.einsum("bic,bjc->bij", r0, r1, preferred_element_type=jnp.float32)

    diff = cosine_matrix(rs) - cosine_matrix(rt)      # (B, K_PAD, K_PAD)
    msq = jnp.mean(diff * diff, axis=0)               # (K_PAD, K_PAD)

    ii = jax.lax.broadcasted_iota(jnp.int32, (k_pad, k_pad), 0)
    jj = jax.lax.broadcasted_iota(jnp.int32, (k_pad, k_pad), 1)
    # Empty classes reproduce the PyTorch skip semantics:
    #   class j empty -> region sums exactly 0 -> cos == 0 on both branches -> +0
    #   class i empty (in any sample) -> 0/0 = NaN -> batch mean NaN -> dropped,
    # matching the data-dependent `gt.sum() != 0` / `torch.isnan` guards.
    valid = (ii < jj) & (jj < num_classes) & jnp.logical_not(jnp.isnan(msq))
    loss = jnp.sum(jnp.where(valid, msq, jnp.float32(0.0)))
    out_ref[...] = jnp.broadcast_to(loss, (1, 1))


def _nearest_indices(out_len, in_len):
    # F.interpolate(..., mode='nearest') source index: floor(dst * in / out).
    return (jnp.arange(out_len) * in_len) // out_len


def _choose_tile_n(n, c, itemsize, k_pad, tile_budget):
    """Largest spatial tile TN whose VMEM footprint fits the tile budget."""
    # Bytes per spatial lane (element of TN), counting everything that scales
    # with TN:
    #   * double-buffered feature tiles        : 2 tensors x 2 buffers x C x itemsize
    #   * in-kernel concat + masked copies     : ~4 x C x itemsize
    #   * int8 labels (double-buffered) + i32 upcast temp : ~6 bytes
    #   * one-hot / bool mask / iota temporaries: ~K_PAD x (itemsize + 8)
    per_lane = 8 * c * itemsize + 6 + k_pad * (itemsize + 8)
    cap = max(128, tile_budget // per_lane)
    if n <= cap:
        return n                    # single tile; block == full dim is always legal
    tn = (cap // 128) * 128
    # Prefer a multiple of 128 that divides N exactly (no partial tail tile).
    for cand in range(tn, 127, -128):
        if n % cand == 0:
            return cand
    return tn


@jax.jit
def rad_loss(logits_s, logits_t, ground_truth):
    b, c, d, h, w = logits_s.shape
    k = NUM_CLASSES
    n = d * h * w
    k_pad = max(8, ((k + 7) // 8) * 8)          # classes padded to a sublane multiple (9 -> 16)

    # --- glue (tiny, pure JAX): nearest-resize the label volume to the feature
    # size, truncate + clamp like `gt.long().clamp(0, K-1)`, and store as int8
    # (smallest HBM traffic); the dense one-hot is built tile-by-tile in kernel 1.
    di = _nearest_indices(d, ground_truth.shape[2])
    hi = _nearest_indices(h, ground_truth.shape[3])
    wi = _nearest_indices(w, ground_truth.shape[4])
    lab = ground_truth[:, 0][:, di][:, :, hi][:, :, :, wi]
    lab = jnp.clip(lab.astype(jnp.int32), 0, k - 1).astype(jnp.int8).reshape(b, 1, n)

    # Features keep their native dtype (bf16 inputs hit the MXU as-is, with f32
    # accumulation); NCDHW -> (B, C, N) is a free row-major reshape.
    s = logits_s.reshape(b, c, n)
    t = logits_t.reshape(b, c, n)

    tn = _choose_tile_n(n, c, jnp.dtype(s.dtype).itemsize, k_pad, _TILE_BUDGET)
    n_tiles = -(-n // tn)
    # Split the spatial reduction into two independent halves so the grid always
    # offers >= 2*B parallel work items (v7x dual-TC; harmless on v5e/v6e).  For
    # odd tile counts the split duplicates one tile (masked to zero in-kernel),
    # only worth it when that duplicate is a small fraction of the work.
    n_split = 2 if (n_tiles >= 2 and (n_tiles % 2 == 0 or n_tiles >= 8)) else 1
    tiles_per_split = -(-n_tiles // n_split)
    needs_mask = (n_split * tiles_per_split * tn) != n
    last_tile = n_tiles - 1

    def spatial_tile(si, ni):
        # Clamp so duplicated / tail iterations still DMA an in-bounds block;
        # their contribution is zeroed by the in-kernel validity mask.
        return jnp.minimum(si * tiles_per_split + ni, last_tile)

    kernel = functools.partial(
        _region_sum_kernel,
        tiles_per_split=tiles_per_split, n_total=n, needs_mask=needs_mask)

    # Kernel 1: per-class region sums (student|teacher fused) + counts,
    # accumulated across spatial tiles.  NO padded HBM copies of s/t/lab.
    rst, cnt = pl.pallas_call(
        kernel,
        grid=(b, n_split, tiles_per_split),
        in_specs=[
            pl.BlockSpec((1, c, tn), lambda bi, si, ni: (bi, 0, spatial_tile(si, ni))),
            pl.BlockSpec((1, c, tn), lambda bi, si, ni: (bi, 0, spatial_tile(si, ni))),
            pl.BlockSpec((1, 1, tn), lambda bi, si, ni: (bi, 0, spatial_tile(si, ni))),
        ],
        out_specs=[
            pl.BlockSpec((1, k_pad, 2 * c), lambda bi, si, ni: (bi * n_split + si, 0, 0)),
            pl.BlockSpec((1, k_pad, 1), lambda bi, si, ni: (bi * n_split + si, 0, 0)),
        ],
        out_shape=[
            jax.ShapeDtypeStruct((b * n_split, k_pad, 2 * c), jnp.float32),
            jax.ShapeDtypeStruct((b * n_split, k_pad, 1), jnp.float32),
        ],
        compiler_params=pltpu.CompilerParams(
            dimension_semantics=("parallel", "parallel", "arbitrary"),
            vmem_limit_bytes=_VMEM_LIMIT,
        ),
    )(s, t, lab)

    # Tiny glue: fold the N-split partial sums and split [student | teacher].
    region = rst.reshape(b, n_split, k_pad, 2 * c).sum(axis=1)
    counts = cnt.reshape(b, n_split, k_pad, 1).sum(axis=1)
    region_s = region[:, :, :c]
    region_t = region[:, :, c:]

    # Kernel 2: tiny -- all region sums fit in VMEM in one shot.
    loss = pl.pallas_call(
        functools.partial(_pair_loss_kernel, num_classes=k),
        out_shape=jax.ShapeDtypeStruct((1, 1), jnp.float32),
    )(region_s, region_t, counts)

    return LOSS_WEIGHT * loss[0, 0]


if __name__ == "__main__":
    key = jax.random.PRNGKey(0)
    ks, kt, kg = jax.random.split(key, 3)

    B, C, D, H, W = 2, 4, 4, 8, 8
    logits_S = jax.random.normal(ks, (B, C, D, H, W), jnp.float32)
    logits_T = jax.random.normal(kt, (B, C, D, H, W), jnp.float32)
    # Ground truth: integer class labels stored as float at a coarser spatial size.
    ground_truth = jax.random.randint(
        kg, (B, 1, 8, 16, 16), 0, NUM_CLASSES).astype(jnp.float32)

    out = rad_loss(logits_S, logits_T, ground_truth)
    jax.block_until_ready(out)
    print("KERNEL_OK")
</pallas_src>

<mosaic_0001>
module attributes {stable_mosaic.version = 11 : i64} {
  func.func @_region_sum_kernel(%arg0: i32, %arg1: i32, %arg2: i32, %arg3: memref<1x4x256xf32, #tpu.memory_space<vmem>>, %arg4: memref<1x4x256xf32, #tpu.memory_space<vmem>>, %arg5: memref<1x1x256xi8, #tpu.memory_space<vmem>>, %arg6: memref<1x16x8xf32, #tpu.memory_space<vmem>>, %arg7: memref<1x16x1xf32, #tpu.memory_space<vmem>>) attributes {dimension_semantics = [#tpu.dimension_semantics<parallel>, #tpu.dimension_semantics<parallel>, #tpu.dimension_semantics<arbitrary>], iteration_bounds = array<i64: 2, 1, 1>, scalar_prefetch = 0 : i64, scratch_operands = 0 : i64, tpu.core_type = #tpu.core_type<tc>, window_params = [{transform_indices = @transform_0, window_bounds = array<i64: 1, 4, 256>}, {transform_indices = @transform_1, window_bounds = array<i64: 1, 4, 256>}, {transform_indices = @transform_2, window_bounds = array<i64: 1, 1, 256>}, {transform_indices = @transform_3, window_bounds = array<i64: 1, 16, 8>}, {transform_indices = @transform_4, window_bounds = array<i64: 1, 16, 1>}]} {
    %c0_i32 = arith.constant 0 : i32
    %0 = arith.cmpi eq, %arg2, %c0_i32 : i32
    %1 = arith.extui %0 : i1 to i32
    %c0_i32_0 = arith.constant 0 : i32
    %2 = arith.cmpi ne, %1, %c0_i32_0 : i32
    scf.if %2 {
      %cst_22 = arith.constant 0.000000e+00 : f32
      %33 = vector.broadcast %cst_22 : f32 to vector<1x16x8xf32>
      %c0_23 = arith.constant 0 : index
      %c0_24 = arith.constant 0 : index
      %c0_25 = arith.constant 0 : index
      %34 = vector.load %arg6[%c0_23, %c0_24, %c0_25] : memref<1x16x8xf32, #tpu.memory_space<vmem>>, vector<1x16x8xf32>
      tpu.vector_store %arg6[%c0_23, %c0_24, %c0_25], %33 {strides = array<i32>} : memref<1x16x8xf32, #tpu.memory_space<vmem>>, vector<1x16x8xf32>,
      %cst_26 = arith.constant 0.000000e+00 : f32
      %35 = vector.broadcast %cst_26 : f32 to vector<1x16x1xf32>
      %c0_27 = arith.constant 0 : index
      %c0_28 = arith.constant 0 : index
      %c0_29 = arith.constant 0 : index
      %36 = vector.load %arg7[%c0_27, %c0_28, %c0_29] : memref<1x16x1xf32, #tpu.memory_space<vmem>>, vector<1x16x1xf32>
      tpu.vector_store %arg7[%c0_27, %c0_28, %c0_29], %35 {strides = array<i32>} : memref<1x16x1xf32, #tpu.memory_space<vmem>>, vector<1x16x1xf32>,
    } else {
    }
    %c0 = arith.constant 0 : index
    %c0_1 = arith.constant 0 : index
    %c0_2 = arith.constant 0 : index
    %3 = vector.load %arg3[%c0, %c0_1, %c0_2] : memref<1x4x256xf32, #tpu.memory_space<vmem>>, vector<1x4x256xf32>
    %4 = vector.shape_cast %3 : vector<1x4x256xf32> to vector<4x256xf32>
    %c0_3 = arith.constant 0 : index
    %c0_4 = arith.constant 0 : index
    %c0_5 = arith.constant 0 : index
    %5 = vector.load %arg4[%c0_3, %c0_4, %c0_5] : memref<1x4x256xf32, #tpu.memory_space<vmem>>, vector<1x4x256xf32>
    %6 = vector.shape_cast %5 : vector<1x4x256xf32> to vector<4x256xf32>
    %c0_6 = arith.constant 0 : index
    %c0_7 = arith.constant 0 : index
    %c0_8 = arith.constant 0 : index
    %7 = vector.load %arg5[%c0_6, %c0_7, %c0_8] : memref<1x1x256xi8, #tpu.memory_space<vmem>>, vector<1x1x256xi8>
    %8 = vector.shape_cast %7 : vector<1x1x256xi8> to vector<1x256xi8>
    %9 = arith.extsi %8 : vector<1x256xi8> to vector<1x256xi32>
    %10 = tpu.iota {dimensions = array<i32: 0>} : vector<16x256xi32>
    %11 = vector.broadcast %9 : vector<1x256xi32> to vector<16x256xi32>
    %12 = arith.cmpi eq, %10, %11 : vector<16x256xi32>
    %13 = arith.extui %12 : vector<16x256xi1> to vector<16x256xi32>
    %14 = arith.sitofp %13 : vector<16x256xi32> to vector<16x256xf32>
    %15 = tpu.concatenate %4, %6 in 0 : vector<4x256xf32>, vector<4x256xf32> -> vector<8x256xf32>
    %c0_9 = arith.constant 0 : index
    %c0_10 = arith.constant 0 : index
    %c0_11 = arith.constant 0 : index
    %16 = vector.load %arg6[%c0_9, %c0_10, %c0_11] : memref<1x16x8xf32, #tpu.memory_space<vmem>>, vector<1x16x8xf32>
    %17 = vector.shape_cast %16 : vector<1x16x8xf32> to vector<16x8xf32>
    %cst = arith.constant dense<0.000000e+00> : vector<16x8xf32>
    %18 = tpu.matmul %14, %15, %cst {dimension_numbers = #tpu.dot_dimension_numbers<[1], [1], [0], [0], [0, 0, 1, 0], [], []>} : vector<16x256xf32>, vector<8x256xf32>, vector<16x8xf32> -> vector<16x8xf32>
    %19 = arith.addf %17, %18 : vector<16x8xf32>
    %c0_12 = arith.constant 0 : index
    %c0_13 = arith.constant 0 : index
    %c0_14 = arith.constant 0 : index
    %20 = vector.load %arg6[%c0_12, %c0_13, %c0_14] : memref<1x16x8xf32, #tpu.memory_space<vmem>>, vector<1x16x8xf32>
    %21 = vector.shape_cast %20 : vector<1x16x8xf32> to vector<16x8xf32>
    %22 = vector.shape_cast %19 : vector<16x8xf32> to vector<1x16x8xf32>
    tpu.vector_store %arg6[%c0_12, %c0_13, %c0_14], %22 {strides = array<i32>} : memref<1x16x8xf32, #tpu.memory_space<vmem>>, vector<1x16x8xf32>,
    %c0_15 = arith.constant 0 : index
    %c0_16 = arith.constant 0 : index
    %c0_17 = arith.constant 0 : index
    %23 = vector.load %arg7[%c0_15, %c0_16, %c0_17] : memref<1x16x1xf32, #tpu.memory_space<vmem>>, vector<1x16x1xf32>
    %24 = vector.shape_cast %23 : vector<1x16x1xf32> to vector<16x1xf32>
    %25 = arith.extui %12 : vector<16x256xi1> to vector<16x256xi32>
    %cst_18 = arith.constant dense<0> : vector<16xi32>
    %26 = vector.multi_reduction <add>, %25, %cst_18 [1] : vector<16x256xi32> to vector<16xi32>
    %27 = vector.shape_cast %26 : vector<16xi32> to vector<16x1xi32>
    %28 = arith.sitofp %27 : vector<16x1xi32> to vector<16x1xf32>
    %29 = arith.addf %24, %28 : vector<16x1xf32>
    %c0_19 = arith.constant 0 : index
    %c0_20 = arith.constant 0 : index
    %c0_21 = arith.constant 0 : index
    %30 = vector.load %arg7[%c0_19, %c0_20, %c0_21] : memref<1x16x1xf32, #tpu.memory_space<vmem>>, vector<1x16x1xf32>
    %31 = vector.shape_cast %30 : vector<1x16x1xf32> to vector<16x1xf32>
    %32 = vector.shape_cast %29 : vector<16x1xf32> to vector<1x16x1xf32>
    tpu.vector_store %arg7[%c0_19, %c0_20, %c0_21], %32 {strides = array<i32>} : memref<1x16x1xf32, #tpu.memory_space<vmem>>, vector<1x16x1xf32>,
    return
  }
  func.func @transform_0(%arg0: i32, %arg1: i32, %arg2: i32) -> (i32, i32, i32) {
    %c1_i32 = arith.constant 1 : i32
    %0 = arith.muli %arg1, %c1_i32 : i32
    %1 = arith.addi %0, %arg2 : i32
    %c0_i32 = arith.constant 0 : i32
    %2 = arith.minsi %1, %c0_i32 : i32
    %c0_i32_0 = arith.constant 0 : i32
    %c0_i32_1 = arith.constant 0 : i32
    return %arg0, %c0_i32_0, %2 : i32, i32, i32
  }
  func.func @transform_1(%arg0: i32, %arg1: i32, %arg2: i32) -> (i32, i32, i32) {
    %c1_i32 = arith.constant 1 : i32
    %0 = arith.muli %arg1, %c1_i32 : i32
    %1 = arith.addi %0, %arg2 : i32
    %c0_i32 = arith.constant 0 : i32
    %2 = arith.minsi %1, %c0_i32 : i32
    %c0_i32_0 = arith.constant 0 : i32
    %c0_i32_1 = arith.constant 0 : i32
    return %arg0, %c0_i32_0, %2 : i32, i32, i32
  }
  func.func @transform_2(%arg0: i32, %arg1: i32, %arg2: i32) -> (i32, i32, i32) {
    %c1_i32 = arith.constant 1 : i32
    %0 = arith.muli %arg1, %c1_i32 : i32
    %1 = arith.addi %0, %arg2 : i32
    %c0_i32 = arith.constant 0 : i32
    %2 = arith.minsi %1, %c0_i32 : i32
    %c0_i32_0 = arith.constant 0 : i32
    %c0_i32_1 = arith.constant 0 : i32
    return %arg0, %c0_i32_0, %2 : i32, i32, i32
  }
  func.func @transform_3(%arg0: i32, %arg1: i32, %arg2: i32) -> (i32, i32, i32) {
    %c1_i32 = arith.constant 1 : i32
    %0 = arith.muli %arg0, %c1_i32 : i32
    %1 = arith.addi %0, %arg1 : i32
    %c0_i32 = arith.constant 0 : i32
    %c0_i32_0 = arith.constant 0 : i32
    %c0_i32_1 = arith.constant 0 : i32
    return %1, %c0_i32, %c0_i32_0 : i32, i32, i32
  }
  func.func @transform_4(%arg0: i32, %arg1: i32, %arg2: i32) -> (i32, i32, i32) {
    %c1_i32 = arith.constant 1 : i32
    %0 = arith.muli %arg0, %c1_i32 : i32
    %1 = arith.addi %0, %arg1 : i32
    %c0_i32 = arith.constant 0 : i32
    %c0_i32_0 = arith.constant 0 : i32
    %c0_i32_1 = arith.constant 0 : i32
    return %1, %c0_i32, %c0_i32_0 : i32, i32, i32
  }
}

module attributes {stable_mosaic.version = 11 : i64} {
  func.func @_pair_loss_kernel(%arg0: memref<2x16x4xf32, #tpu.memory_space<vmem>>, %arg1: memref<2x16x4xf32, #tpu.memory_space<vmem>>, %arg2: memref<2x16x1xf32, #tpu.memory_space<vmem>>, %arg3: memref<1x1xf32, #tpu.memory_space<vmem>>) attributes {dimension_semantics = [], scalar_prefetch = 0 : i64, scratch_operands = 0 : i64, tpu.core_type = #tpu.core_type<tc>} {
    %c0 = arith.constant 0 : index
    %c0_0 = arith.constant 0 : index
    %c0_1 = arith.constant 0 : index
    %0 = vector.load %arg0[%c0, %c0_0, %c0_1] : memref<2x16x4xf32, #tpu.memory_space<vmem>>, vector<2x16x4xf32>
    %c0_2 = arith.constant 0 : index
    %c0_3 = arith.constant 0 : index
    %c0_4 = arith.constant 0 : index
    %1 = vector.load %arg1[%c0_2, %c0_3, %c0_4] : memref<2x16x4xf32, #tpu.memory_space<vmem>>, vector<2x16x4xf32>
    %c0_5 = arith.constant 0 : index
    %c0_6 = arith.constant 0 : index
    %c0_7 = arith.constant 0 : index
    %2 = vector.load %arg2[%c0_5, %c0_6, %c0_7] : memref<2x16x1xf32, #tpu.memory_space<vmem>>, vector<2x16x1xf32>
    %3 = vector.broadcast %2 : vector<2x16x1xf32> to vector<2x16x4xf32>
    %4 = arith.divf %0, %3 : vector<2x16x4xf32>
    %cst = arith.constant 1.000000e+00 : f32
    %5 = vector.broadcast %cst : f32 to vector<2x16x1xf32>
    %6 = arith.addf %2, %5 : vector<2x16x1xf32>
    %7 = vector.broadcast %6 : vector<2x16x1xf32> to vector<2x16x4xf32>
    %8 = arith.divf %0, %7 : vector<2x16x4xf32>
    %9 = arith.mulf %4, %4 : vector<2x16x4xf32>
    %cst_8 = arith.constant dense<0.000000e+00> : vector<2x16xf32>
    %10 = vector.multi_reduction <add>, %9, %cst_8 [2] : vector<2x16x4xf32> to vector<2x16xf32>
    %11 = vector.shape_cast %10 : vector<2x16xf32> to vector<2x16x1xf32>
    %12 = math.sqrt %11 : vector<2x16x1xf32>
    %cst_9 = arith.constant 9.99999993E-9 : f32
    %13 = vector.broadcast %cst_9 : f32 to vector<2x16x1xf32>
    %14 = arith.maximumf %12, %13 : vector<2x16x1xf32>
    %15 = arith.mulf %8, %8 : vector<2x16x4xf32>
    %cst_10 = arith.constant dense<0.000000e+00> : vector<2x16xf32>
    %16 = vector.multi_reduction <add>, %15, %cst_10 [2] : vector<2x16x4xf32> to vector<2x16xf32>
    %17 = vector.shape_cast %16 : vector<2x16xf32> to vector<2x16x1xf32>
    %18 = math.sqrt %17 : vector<2x16x1xf32>
    %cst_11 = arith.constant 9.99999993E-9 : f32
    %19 = vector.broadcast %cst_11 : f32 to vector<2x16x1xf32>
    %20 = arith.maximumf %18, %19 : vector<2x16x1xf32>
    %21 = vector.broadcast %14 : vector<2x16x1xf32> to vector<2x16x4xf32>
    %22 = arith.divf %4, %21 : vector<2x16x4xf32>
    %23 = vector.broadcast %20 : vector<2x16x1xf32> to vector<2x16x4xf32>
    %24 = arith.divf %8, %23 : vector<2x16x4xf32>
    "tpu.trace_start"() <{level = 10 : i32, message = "bic,bjc->bij"}> : () -> ()
    %cst_12 = arith.constant dense<0.000000e+00> : vector<2x16x16xf32>
    %25 = tpu.matmul %22, %24, %cst_12 {dimension_numbers = #tpu.dot_dimension_numbers<[2], [2], [1], [1], [0, 0, 0, 1, 1, 1], [0], [0]>} : vector<2x16x4xf32>, vector<2x16x4xf32>, vector<2x16x16xf32> -> vector<2x16x16xf32>
    "tpu.trace_stop"() : () -> ()
    %26 = vector.broadcast %2 : vector<2x16x1xf32> to vector<2x16x4xf32>
    %27 = arith.divf %1, %26 : vector<2x16x4xf32>
    %cst_13 = arith.constant 1.000000e+00 : f32
    %28 = vector.broadcast %cst_13 : f32 to vector<2x16x1xf32>
    %29 = arith.addf %2, %28 : vector<2x16x1xf32>
    %30 = vector.broadcast %29 : vector<2x16x1xf32> to vector<2x16x4xf32>
    %31 = arith.divf %1, %30 : vector<2x16x4xf32>
    %32 = arith.mulf %27, %27 : vector<2x16x4xf32>
    %cst_14 = arith.constant dense<0.000000e+00> : vector<2x16xf32>
    %33 = vector.multi_reduction <add>, %32, %cst_14 [2] : vector<2x16x4xf32> to vector<2x16xf32>
    %34 = vector.shape_cast %33 : vector<2x16xf32> to vector<2x16x1xf32>
    %35 = math.sqrt %34 : vector<2x16x1xf32>
    %cst_15 = arith.constant 9.99999993E-9 : f32
    %36 = vector.broadcast %cst_15 : f32 to vector<2x16x1xf32>
    %37 = arith.maximumf %35, %36 : vector<2x16x1xf32>
    %38 = arith.mulf %31, %31 : vector<2x16x4xf32>
    %cst_16 = arith.constant dense<0.000000e+00> : vector<2x16xf32>
    %39 = vector.multi_reduction <add>, %38, %cst_16 [2] : vector<2x16x4xf32> to vector<2x16xf32>
    %40 = vector.shape_cast %39 : vector<2x16xf32> to vector<2x16x1xf32>
    %41 = math.sqrt %40 : vector<2x16x1xf32>
    %cst_17 = arith.constant 9.99999993E-9 : f32
    %42 = vector.broadcast %cst_17 : f32 to vector<2x16x1xf32>
    %43 = arith.maximumf %41, %42 : vector<2x16x1xf32>
    %44 = vector.broadcast %37 : vector<2x16x1xf32> to vector<2x16x4xf32>
    %45 = arith.divf %27, %44 : vector<2x16x4xf32>
    %46 = vector.broadcast %43 : vector<2x16x1xf32> to vector<2x16x4xf32>
    %47 = arith.divf %31, %46 : vector<2x16x4xf32>
    "tpu.trace_start"() <{level = 10 : i32, message = "bic,bjc->bij"}> : () -> ()
    %cst_18 = arith.constant dense<0.000000e+00> : vector<2x16x16xf32>
    %48 = tpu.matmul %45, %47, %cst_18 {dimension_numbers = #tpu.dot_dimension_numbers<[2], [2], [1], [1], [0, 0, 0, 1, 1, 1], [0], [0]>} : vector<2x16x4xf32>, vector<2x16x4xf32>, vector<2x16x16xf32> -> vector<2x16x16xf32>
    "tpu.trace_stop"() : () -> ()
    %49 = arith.subf %25, %48 : vector<2x16x16xf32>
    %50 = arith.mulf %49, %49 : vector<2x16x16xf32>
    %cst_19 = arith.constant dense<0.000000e+00> : vector<16x16xf32>
    %51 = vector.multi_reduction <add>, %50, %cst_19 [0] : vector<2x16x16xf32> to vector<16x16xf32>
    %cst_20 = arith.constant 2.000000e+00 : f32
    %52 = vector.broadcast %cst_20 : f32 to vector<16x16xf32>
    %53 = arith.divf %51, %52 : vector<16x16xf32>
    %54 = tpu.iota {dimensions = array<i32: 0>} : vector<16x16xi32>
    %55 = tpu.iota {dimensions = array<i32: 1>} : vector<16x16xi32>
    %56 = arith.cmpi slt, %54, %55 : vector<16x16xi32>
    %c9_i32 = arith.constant 9 : i32
    %57 = vector.broadcast %c9_i32 : i32 to vector<16x16xi32>
    %58 = arith.cmpi slt, %55, %57 : vector<16x16xi32>
    %59 = arith.andi %56, %58 : vector<16x16xi1>
    %60 = arith.cmpf one, %53, %53 : vector<16x16xf32>
    %cst_21 = arith.constant dense<true> : vector<16x16xi1>
    %61 = arith.xori %60, %cst_21 : vector<16x16xi1>
    %62 = arith.andi %59, %61 : vector<16x16xi1>
    %cst_22 = arith.constant 0.000000e+00 : f32
    %63 = vector.broadcast %cst_22 : f32 to vector<16x16xf32>
    %64 = arith.select %62, %53, %63 : vector<16x16xi1>, vector<16x16xf32>
    %65 = vector.shape_cast %64 : vector<16x16xf32> to vector<1x16x16xf32>
    %cst_23 = arith.constant dense<0.000000e+00> : vector<1xf32>
    %66 = vector.multi_reduction <add>, %65, %cst_23 [1, 2] : vector<1x16x16xf32> to vector<1xf32>
    %67 = vector.shape_cast %66 : vector<1xf32> to vector<1x1x1xf32>
    %68 = vector.extract %67[0, 0, 0] : f32 from vector<1x1x1xf32>
    %69 = vector.broadcast %68 : f32 to vector<1x1xf32>
    %c0_24 = arith.constant 0 : index
    %c0_25 = arith.constant 0 : index
    %70 = vector.load %arg3[%c0_24, %c0_25] : memref<1x1xf32, #tpu.memory_space<vmem>>, vector<1x1xf32>
    tpu.vector_store %arg3[%c0_24, %c0_25], %69 {strides = array<i32>} : memref<1x1xf32, #tpu.memory_space<vmem>>, vector<1x1xf32>,
    return
  }
}

</mosaic_0001>

<llo_original>
// kernel: rad_loss.2
$region0: #{rad_loss.2}
  #allocation0 [shape = 'u32[]', space=smem, size = 0x4, offset = 0x4, fixed_abs, tag = 'smem constant byte address 0x4 - core index']
  #allocation1 [shape = 'u32[144,128]{1,0:T(1,128)}', space=vmem, size = 0x12000, scoped, tag = 'internal scratch']
  %s0 = inlined_call_operand.vmem [shape: f32[2,4,256], index: 0, kind: input, shape index: {}]
  %s1 = inlined_call_operand.vmem [shape: f32[2,4,256], index: 1, kind: input, shape index: {}]
  %s2 = inlined_call_operand.vmem [shape: s8[2,1,256], index: 2, kind: input, shape index: {}]
  %s3 = inlined_call_operand.vmem [shape: f32[2,16,8], index: 3, kind: output, shape index: {0}]
  %s4 = inlined_call_operand.vmem [shape: f32[2,16,1], index: 4, kind: output, shape index: {1}]
  %5 = xla_tuple %s3, %s4
  %s6 = sld [smem:[#allocation0]]
  $region57: #{rad_loss.2} parent=0
    _
  %s8 = ssub.s32 1, %s6
  %s9 = scalar_select 0, %s8, %s6
  loop: start=0, step=1, limit=4
  $region2: #{rad_loss.2} parent=0 // loop_pre_header
    _
  $region3: #{rad_loss.2} parent=0 // loop_header
    %s11 = sphi 0, %s15
    %p12 = scmp.ge.s32.totalorder %s11, 4
    %s18 = sphi 0, %s37
    %s19 = sphi 0, %s33
    %s20 = sphi 0, %s29
    %s21 = sphi 0, %s18
    %s22 = sphi 0, %s19
    %s23 = sphi 0, %s20
    %s24 = sphi 0, %s21
    %s25 = sphi 0, %s22
    %s26 = sphi 0, %s23
    %s48 = sphi 0, %s50
    %s51 = sphi 0, %s48
    %s52 = sphi 0, %s51
    %s68 = sphi 0, %s52
    %s82 = sphi 0, %s84
    %s85 = sphi 0, %s82
    %s86 = sphi 0, %s85
    %s102 = sphi 0, %s86
    %s116 = sphi 0, %s118
    %s119 = sphi 0, %s116
    %s120 = sphi 0, %s119
    %s136 = sphi 0, %s120
    %s144 = sphi 0, %s146
    %s147 = sphi 0, %s144
    %s148 = sphi 0, %s147
    %s164 = sphi 0, %s148
    %s172 = sphi 0, %s174
    %s175 = sphi 0, %s172
    %s176 = sphi 0, %s175
    %s192 = sphi 0, %s176
  $region4: #{rad_loss.2} parent=0 // loop_header_branch
    %14 = sbr.rel (%p12) target = $region8
  $region5: #{rad_loss.2} parent=0 // loop_body
    %s16 = ssub.s32 %s11, 1
    %s17 = ssub.s32 %s11, 2
    %s27 = sadd.s32 1, %s20
    %p28 = scmp.ge.s32.totalorder %s27, 1
    %s29 = scalar_select %p28, 0, %s27
    %s30 = sadd.s32 1, %s19
    %s31 = scalar_select %p28, %s30, %s19
    %p32 = scmp.ge.s32.totalorder %s31, 1
    %s33 = scalar_select %p32, 0, %s31
    %s34 = sadd.s32 1, %s18
    %s35 = scalar_select %p32, %s34, %s18
    %p36 = scmp.ge.s32.totalorder %s35, 2
    %s37 = scalar_select %p36, 0, %s35
    %s38 = sadd.s32 %s19, %s20
    %p39 = scmp.lt.s32.totalorder %s38, 0
    %s40 = scalar_select %p39, %s38, 0
    %s41 = sadd.s32 %s33, %s29
    %p42 = scmp.lt.s32.totalorder %s41, 0
    %s43 = scalar_select %p42, %s41, 0
    %s44 = ssub.s32 %s18, %s37
    %s45 = ssub.s32 %s40, %s43
    %s46 = sor.u32 %s44, %s45
    %p47 = scmp.eq.s32.totalorder %s46, 0
    %s49 = sadd.s32 %s48, 1
    %s50 = scalar_select %p47, %s48, %s49
    %p53 = pneg %p47
    %p54 = scmp.eq.s32.totalorder %s11, 1
    %p55 = por %p53, %p54
    %p56 = scmp.ne.s32.totalorder %s48, %s51
    %p57 = scmp.eq.s32.totalorder %s11, 0
    %p58 = por %p56, %p57
    %p59 = scmp.ne.s32.totalorder %s48, %s51
    %p60 = scmp.eq.s32.totalorder %s16, 1
    %p61 = por %p59, %p60
    %p62 = scmp.ne.s32.totalorder %s51, %s52
    %p63 = scmp.eq.s32.totalorder %s16, 0
    %p64 = por %p62, %p63
    %p65 = scmp.ne.s32.totalorder %s51, %s52
    %p66 = scmp.eq.s32.totalorder %s17, 1
    %p67 = por %p65, %p66
    %p69 = scmp.ne.s32.totalorder %s52, %s68
    %p70 = scmp.eq.s32.totalorder %s17, 0
    %p71 = por %p69, %p70
    %s72 = sadd.s32 %s19, %s20
    %p73 = scmp.lt.s32.totalorder %s72, 0
    %s74 = scalar_select %p73, %s72, 0
    %s75 = sadd.s32 %s33, %s29
    %p76 = scmp.lt.s32.totalorder %s75, 0
    %s77 = scalar_select %p76, %s75, 0
    %s78 = ssub.s32 %s18, %s37
    %s79 = ssub.s32 %s74, %s77
    %s80 = sor.u32 %s78, %s79
    %p81 = scmp.eq.s32.totalorder %s80, 0
    %s83 = sadd.s32 %s82, 1
    %s84 = scalar_select %p81, %s82, %s83
    %p87 = pneg %p81
    %p88 = scmp.eq.s32.totalorder %s11, 1
    %p89 = por %p87, %p88
    %p90 = scmp.ne.s32.totalorder %s82, %s85
    %p91 = scmp.eq.s32.totalorder %s11, 0
    %p92 = por %p90, %p91
    %p93 = scmp.ne.s32.totalorder %s82, %s85
    %p94 = scmp.eq.s32.totalorder %s16, 1
    %p95 = por %p93, %p94
    %p96 = scmp.ne.s32.totalorder %s85, %s86
    %p97 = scmp.eq.s32.totalorder %s16, 0
    %p98 = por %p96, %p97
    %p99 = scmp.ne.s32.totalorder %s85, %s86
    %p100 = scmp.eq.s32.totalorder %s17, 1
    %p101 = por %p99, %p100
    %p103 = scmp.ne.s32.totalorder %s86, %s102
    %p104 = scmp.eq.s32.totalorder %s17, 0
    %p105 = por %p103, %p104
    %s106 = sadd.s32 %s19, %s20
    %p107 = scmp.lt.s32.totalorder %s106, 0
    %s108 = scalar_select %p107, %s106, 0
    %s109 = sadd.s32 %s33, %s29
    %p110 = scmp.lt.s32.totalorder %s109, 0
    %s111 = scalar_select %p110, %s109, 0
    %s112 = ssub.s32 %s18, %s37
    %s113 = ssub.s32 %s108, %s111
    %s114 = sor.u32 %s112, %s113
    %p115 = scmp.eq.s32.totalorder %s114, 0
    %s117 = sadd.s32 %s116, 1
    %s118 = scalar_select %p115, %s116, %s117
    %p121 = pneg %p115
    %p122 = scmp.eq.s32.totalorder %s11, 1
    %p123 = por %p121, %p122
    %p124 = scmp.ne.s32.totalorder %s116, %s119
    %p125 = scmp.eq.s32.totalorder %s11, 0
    %p126 = por %p124, %p125
    %p127 = scmp.ne.s32.totalorder %s116, %s119
    %p128 = scmp.eq.s32.totalorder %s16, 1
    %p129 = por %p127, %p128
    %p130 = scmp.ne.s32.totalorder %s119, %s120
    %p131 = scmp.eq.s32.totalorder %s16, 0
    %p132 = por %p130, %p131
    %p133 = scmp.ne.s32.totalorder %s119, %s120
    %p134 = scmp.eq.s32.totalorder %s17, 1
    %p135 = por %p133, %p134
    %p137 = scmp.ne.s32.totalorder %s120, %s136
    %p138 = scmp.eq.s32.totalorder %s17, 0
    %p139 = por %p137, %p138
    %s140 = sadd.s32 %s18, %s19
    %s141 = sadd.s32 %s37, %s33
    %s142 = ssub.s32 %s140, %s141
    %p143 = scmp.eq.s32.totalorder %s142, 0
    %s145 = sadd.s32 %s144, 1
    %s146 = scalar_select %p143, %s144, %s145
    %p149 = pneg %p143
    %p150 = scmp.eq.s32.totalorder %s11, 1
    %p151 = por %p149, %p150
    %p152 = scmp.ne.s32.totalorder %s144, %s147
    %p153 = scmp.eq.s32.totalorder %s11, 0
    %p154 = por %p152, %p153
    %p155 = scmp.ne.s32.totalorder %s144, %s147
    %p156 = scmp.eq.s32.totalorder %s16, 1
    %p157 = por %p155, %p156
    %p158 = scmp.ne.s32.totalorder %s147, %s148
    %p159 = scmp.eq.s32.totalorder %s16, 0
    %p160 = por %p158, %p159
    %p161 = scmp.ne.s32.totalorder %s147, %s148
    %p162 = scmp.eq.s32.totalorder %s17, 1
    %p163 = por %p161, %p162
    %p165 = scmp.ne.s32.totalorder %s148, %s164
    %p166 = scmp.eq.s32.totalorder %s17, 0
    %p167 = por %p165, %p166
    %s168 = sadd.s32 %s18, %s19
    %s169 = sadd.s32 %s37, %s33
    %s170 = ssub.s32 %s168, %s169
    %p171 = scmp.eq.s32.totalorder %s170, 0
    %s173 = sadd.s32 %s172, 1
    %s174 = scalar_select %p171, %s172, %s173
    %p177 = pneg %p171
    %p178 = scmp.eq.s32.totalorder %s11, 1
    %p179 = por %p177, %p178
    %p180 = scmp.ne.s32.totalorder %s172, %s175
    %p181 = scmp.eq.s32.totalorder %s11, 0
    %p182 = por %p180, %p181
    %p183 = scmp.ne.s32.totalorder %s172, %s175
    %p184 = scmp.eq.s32.totalorder %s16, 1
    %p185 = por %p183, %p184
    %p186 = scmp.ne.s32.totalorder %s175, %s176
    %p187 = scmp.eq.s32.totalorder %s16, 0
    %p188 = por %p186, %p187
    %p189 = scmp.ne.s32.totalorder %s175, %s176
    %p190 = scmp.eq.s32.totalorder %s17, 1
    %p191 = por %p189, %p190
    %p193 = scmp.ne.s32.totalorder %s176, %s192
    %p194 = scmp.eq.s32.totalorder %s17, 0
    %p195 = por %p193, %p194
    %p196 = scmp.le.s32.totalorder 1, %s11
    %p197 = scmp.lt.s32.totalorder %s11, 3
    %p198 = pnand %p196, %p197
    %p199 = pneg %p198
    // Predicated region
    $region9: #{rad_loss.2} parent=5 // pred_check
      _
    $region10: #{rad_loss.2} parent=5 // pred_check_branch
      %201 = sbr.rel (%p198) target = $region12
    $region11: #{rad_loss.2} parent=5 // pred_region
      %s202 = ssub.s32 %s11, 1
    $region12: #{rad_loss.2} parent=5 // pred_fallthru
      _
    %p203 = scmp.lt.s32.totalorder %s11, 2
    // Predicated region
    $region13: #{rad_loss.2} parent=5 // pred_check
      %p204 = pneg %p203
    $region14: #{rad_loss.2} parent=5 // pred_check_branch
      %206 = sbr.rel (%p204) target = $region16
    $region15: #{rad_loss.2} parent=5 // pred_region
      // Predicated region
      $region17: #{rad_loss.2} parent=15 // pred_check
        %p207 = pneg %p58
      $region18: #{rad_loss.2} parent=15 // pred_check_branch
        %209 = sbr.rel (%p207) target = $region20
      $region19: #{rad_loss.2} parent=15 // pred_region
        %s210 = sadd.s32 %s19, %s20
        %p211 = scmp.lt.s32.totalorder %s210, 0
        %s212 = scalar_select %p211, %s210, 0
        %s213 = smul.u32 2, %s212
        %p214 = scmp.lt.s32.totalorder %s18, 1
        %s215 = scalar_select %p214, %s18, 1
        %p216 = scmp.lt.s32.totalorder %s213, 1
        %s217 = scalar_select %p216, %s213, 1
        %s218 = smul.addr %s215, 2
        %s219 = sadd.s32 %s217, %s218
        %s220 = smul.addr %s219, 4
        %s221 = scalar_lea.vmem %s0, %s220
        %s222 = sadd.s32 %s19, %s20
        %p223 = scmp.lt.s32.totalorder %s222, 0
        %s224 = scalar_select %p223, %s222, 0
        %s225 = smul.u32 2, %s224
      $region20: #{rad_loss.2} parent=15 // pred_fallthru
        _
      // Predicated region
      $region21: #{rad_loss.2} parent=15 // pred_check
        %p226 = pneg %p92
      $region22: #{rad_loss.2} parent=15 // pred_check_branch
        %228 = sbr.rel (%p226) target = $region24
      $region23: #{rad_loss.2} parent=15 // pred_region
        %s229 = sadd.s32 %s19, %s20
        %p230 = scmp.lt.s32.totalorder %s229, 0
        %s231 = scalar_select %p230, %s229, 0
        %s232 = smul.u32 2, %s231
        %p233 = scmp.lt.s32.totalorder %s18, 1
        %s234 = scalar_select %p233, %s18, 1
        %p235 = scmp.lt.s32.totalorder %s232, 1
        %s236 = scalar_select %p235, %s232, 1
        %s237 = smul.addr %s234, 2
        %s238 = sadd.s32 %s236, %s237
        %s239 = smul.addr %s238, 4
        %s240 = scalar_lea.vmem %s1, %s239
        %s241 = sadd.s32 %s19, %s20
        %p242 = scmp.lt.s32.totalorder %s241, 0
        %s243 = scalar_select %p242, %s241, 0
        %s244 = smul.u32 2, %s243
      $region24: #{rad_loss.2} parent=15 // pred_fallthru
        _
      // Predicated region
      $region25: #{rad_loss.2} parent=15 // pred_check
        %p245 = pneg %p126
      $region26: #{rad_loss.2} parent=15 // pred_check_branch
        %247 = sbr.rel (%p245) target = $region28
      $region27: #{rad_loss.2} parent=15 // pred_region
        %s248 = sadd.s32 %s19, %s20
        %p249 = scmp.lt.s32.totalorder %s248, 0
        %s250 = scalar_select %p249, %s248, 0
        %s251 = smul.u32 2, %s250
        %p252 = scmp.lt.s32.totalorder %s18, 1
        %s253 = scalar_select %p252, %s18, 1
        %p254 = scmp.lt.s32.totalorder %s251, 1
        %s255 = scalar_select %p254, %s251, 1
        %s256 = smul.addr %s253, 2
        %s257 = sadd.s32 %s255, %s256
        %s258 = scalar_lea.vmem %s2, %s257
        %s259 = sadd.s32 %s19, %s20
        %p260 = scmp.lt.s32.totalorder %s259, 0
        %s261 = scalar_select %p260, %s259, 0
        %s262 = smul.u32 2, %s261
      $region28: #{rad_loss.2} parent=15 // pred_fallthru
        _
    $region16: #{rad_loss.2} parent=5 // pred_fallthru
      _
    %p263 = scmp.le.s32.totalorder 1, %s11
    %p264 = scmp.lt.s32.totalorder %s11, 3
    %p265 = pnand %p263, %p264
    %p266 = pneg %p265
    // Predicated region
    $region29: #{rad_loss.2} parent=5 // pred_check
      _
    $region30: #{rad_loss.2} parent=5 // pred_check_branch
      %268 = sbr.rel (%p265) target = $region32
    $region31: #{rad_loss.2} parent=5 // pred_region
      %s269 = ssub.s32 %s11, 1
      %s270 = sadd.s32 %s22, %s23
      %p271 = scmp.lt.s32.totalorder %s270, 0
      %s272 = scalar_select %p271, %s270, 0
      %s273 = smul.u32 2, %s272
      %p274 = scmp.lt.s32.totalorder %s21, 1
      %s275 = scalar_select %p274, %s21, 1
      %p276 = scmp.lt.s32.totalorder %s273, 1
      %s277 = scalar_select %p276, %s273, 1
      %s278 = smul.addr %s275, 2
      %s279 = sadd.s32 %s277, %s278
      %s280 = smul.addr %s279, 4
      %s281 = scalar_lea.vmem %s0, %s280
      %p282 = pneg %p64
      %p283 = pneg %p61
      %s284 = sadd.s32 %s22, %s23
      %p285 = scmp.lt.s32.totalorder %s284, 0
      %s286 = scalar_select %p285, %s284, 0
      %s287 = smul.u32 2, %s286
      %p288 = scmp.lt.s32.totalorder %s21, 1
      %s289 = scalar_select %p288, %s21, 1
      %p290 = scmp.lt.s32.totalorder %s287, 1
      %s291 = scalar_select %p290, %s287, 1
      %s292 = smul.addr %s289, 2
      %s293 = sadd.s32 %s291, %s292
      %s294 = smul.addr %s293, 4
      %s295 = scalar_lea.vmem %s1, %s294
      %p296 = pneg %p98
      %p297 = pneg %p95
      %s298 = sadd.s32 %s22, %s23
      %p299 = scmp.lt.s32.totalorder %s298, 0
      %s300 = scalar_select %p299, %s298, 0
      %s301 = smul.u32 2, %s300
      %p302 = scmp.lt.s32.totalorder %s21, 1
      %s303 = scalar_select %p302, %s21, 1
      %p304 = scmp.lt.s32.totalorder %s301, 1
      %s305 = scalar_select %p304, %s301, 1
      %s306 = smul.addr %s303, 2
      %s307 = sadd.s32 %s305, %s306
      %s308 = scalar_lea.vmem %s2, %s307
      %p309 = pneg %p132
      %p310 = pneg %p129
      %p311 = pneg %p160
      %p312 = pneg %p157
      %s313 = sadd.s32 %s21, %s22
      %p314 = scmp.lt.s32.totalorder %s313, 1
      %s315 = scalar_select %p314, %s313, 1
      %s316 = smul.addr %s315, 2
      %s317 = smul.addr %s316, 8
      %s318 = scalar_lea.vmem %s3, %s317
      %p319 = pneg %p188
      %p320 = pneg %p185
      %s321 = sadd.s32 %s21, %s22
      %p322 = scmp.lt.s32.totalorder %s321, 1
      %s323 = scalar_select %p322, %s321, 1
      %s324 = smul.addr %s323, 2
      %s325 = smul.addr %s324, 8
      %s326 = scalar_lea.vmem %s4, %s325
      %s327 = sadd.s32 %s22, %s23
      %p328 = scmp.lt.s32.totalorder %s327, 0
      %s329 = scalar_select %p328, %s327, 0
      %s330 = smul.u32 2, %s329
      %p331 = scmp.lt.s32.totalorder %s21, 1
      %s332 = scalar_select %p331, %s21, 1
      %p333 = scmp.lt.s32.totalorder %s330, 1
      %s334 = scalar_select %p333, %s330, 1
      %s335 = smul.addr %s332, 2
      %s336 = sadd.s32 %s334, %s335
      %s337 = smul.addr %s336, 4
      %s338 = scalar_lea.vmem %s0, %s337
      %s339 = sadd.s32 %s22, %s23
      %p340 = scmp.lt.s32.totalorder %s339, 0
      %s341 = scalar_select %p340, %s339, 0
      %s342 = smul.u32 2, %s341
      %s343 = sadd.s32 %s22, %s23
      %p344 = scmp.lt.s32.totalorder %s343, 0
      %s345 = scalar_select %p344, %s343, 0
      %s346 = smul.u32 2, %s345
      %p347 = scmp.lt.s32.totalorder %s21, 1
      %s348 = scalar_select %p347, %s21, 1
      %p349 = scmp.lt.s32.totalorder %s346, 1
      %s350 = scalar_select %p349, %s346, 1
      %s351 = smul.addr %s348, 2
      %s352 = sadd.s32 %s350, %s351
      %s353 = smul.addr %s352, 4
      %s354 = scalar_lea.vmem %s1, %s353
      %s355 = sadd.s32 %s22, %s23
      %p356 = scmp.lt.s32.totalorder %s355, 0
      %s357 = scalar_select %p356, %s355, 0
      %s358 = smul.u32 2, %s357
      %s359 = sadd.s32 %s22, %s23
      %p360 = scmp.lt.s32.totalorder %s359, 0
      %s361 = scalar_select %p360, %s359, 0
      %s362 = smul.u32 2, %s361
      %p363 = scmp.lt.s32.totalorder %s21, 1
      %s364 = scalar_select %p363, %s21, 1
      %p365 = scmp.lt.s32.totalorder %s362, 1
      %s366 = scalar_select %p365, %s362, 1
      %s367 = smul.addr %s364, 2
      %s368 = sadd.s32 %s366, %s367
      %s369 = scalar_lea.vmem %s2, %s368
      %s370 = sadd.s32 %s22, %s23
      %p371 = scmp.lt.s32.totalorder %s370, 0
      %s372 = scalar_select %p371, %s370, 0
      %s373 = smul.u32 2, %s372
      %s374 = sadd.s32 %s21, %s22
      %p375 = scmp.lt.s32.totalorder %s374, 1
      %s376 = scalar_select %p375, %s374, 1
      %s377 = smul.addr %s376, 2
      %s378 = smul.addr %s377, 8
      %s379 = scalar_lea.vmem %s3, %s378
      %s380 = sadd.s32 %s21, %s22
      %s381 = sadd.s32 %s21, %s22
      %p382 = scmp.lt.s32.totalorder %s381, 1
      %s383 = scalar_select %p382, %s381, 1
      %s384 = smul.addr %s383, 2
      %s385 = smul.addr %s384, 8
      %s386 = scalar_lea.vmem %s4, %s385
      %s387 = sadd.s32 %s21, %s22
      %p388 = scmp.eq.s32.totalorder %s23, 0
      // Predicated region
      $region33: #{rad_loss.2} parent=31 // pred_check
        %p389 = pneg %p388
      $region34: #{rad_loss.2} parent=31 // pred_check_branch
        %391 = sbr.rel (%p389) target = $region36
      $region35: #{rad_loss.2} parent=31 // pred_region
        %vm392 = vcmask 64512
        %393 = vst.msk [vmem:[%s379] sm:$0xff] %vm392, 0.0
        %394 = vst.msk [vmem:[%s379 + $0x8] sm:$0xff] %vm392, 0.0
        %vm395 = vcmask 7168
        %396 = vst.msk [vmem:[%s386] sm:$0xff] %vm395, 0.0
        %397 = vst.msk [vmem:[%s386 + $0x8] sm:$0xff] %vm395, 0.0
      $region36: #{rad_loss.2} parent=31 // pred_fallthru
        _
      %v398 = vld [vmem:[%s338] sm:$0xff]
      %v399 = vld [vmem:[%s354] sm:$0xff]
      %v400 = vld [vmem:[%s369] sm:$0x3]
      %v401 = vunpack.c.0.s8 %v400
      %v402 = vlaneseq
      %v403 = vshrl.u32 %v402, 7
      %v404 = vadd.s32 %v403, 8
      %v405 = vlaneseq
      %v406 = vshrl.u32 %v405, 7
      %v407 = vsub.s32 0, %v406
      %v408 = vrot.slane %v401, %v407
      %v409 = vlaneseq
      %v410 = vshrl.u32 %v409, 7
      %v411 = vsub.s32 4, %v410
      %v412 = vrot.slane %v401, %v411
      %v413 = vlaneseq
      %v414 = vshrl.u32 %v413, 7
      %v415 = vsub.s32 0, %v414
      %v416 = vrot.slane %v408, %v415
      %v417 = vlaneseq
      %v418 = vshrl.u32 %v417, 7
      %v419 = vsub.s32 0, %v418
      %v420 = vrot.slane %v412, %v419
      %vm421 = vcmp.eq.s32.totalorder %v403, %v416
      %vm422 = vcmp.eq.s32.totalorder %v403, %v420
      %vm423 = vcmp.eq.s32.totalorder %v404, %v416
      %vm424 = vcmp.eq.s32.totalorder %v404, %v420
      %v425 = vsel %vm421, 1, 0
      %v426 = vsel %vm422, 1, 0
      %v427 = vsel %vm423, 1, 0
      %v428 = vsel %vm424, 1, 0
      %v429 = vcvt.s32.f32 %v425
      %v430 = vcvt.s32.f32 %v426
      %v431 = vcvt.s32.f32 %v427
      %v432 = vcvt.s32.f32 %v428
      %v434 = vcombine.high %v398, %v398
      %v437 = vcombine.low %v399, %v399
      %vm439 = vcmask 1043456
      %v440 = vsel %vm439, %v398, %v437
      %v441 = vsel %vm439, %v434, %v399
      %v442 = vld [vmem:[%s379] sm:$0xff]
      %v443 = vld [vmem:[%s379 + $0x8] sm:$0xff]
      %444 = vmatprep.subr.mxu0 0.0
      %445 = vmatpush1.xpose.msra.mxu0 0.0
      %446 = vmatprep.subr.mxu0 0.0
      %447 = vmatpush1.xpose.msra.mxu0 0.0
      %448 = vmatprep.subr.mxu0 0.0
      %449 = vmatpush1.xpose.msra.mxu0 0.0
      %450 = vmatprep.subr.mxu0 0.0
      %451 = vmatpush1.xpose.msra.mxu0 0.0
      %452 = vmatprep.subr.mxu0 0.0
      %453 = vmatpush1.xpose.msra.mxu0 0.0
      %454 = vmatprep.subr.mxu0 0.0
      %455 = vmatpush1.xpose.msra.mxu0 0.0
      %456 = vmatprep.subr.mxu0 0.0
      %457 = vmatpush1.xpose.msra.mxu0 0.0
      %458 = vmatprep.subr.mxu0 0.0
      %459 = vmatpush1.xpose.msra.mxu0 0.0
      %460 = vmatprep.subr.mxu0 0.0
      %461 = vmatpush1.xpose.msra.mxu0 0.0
      %462 = vmatprep.subr.mxu0 0.0
      %463 = vmatpush1.xpose.msra.mxu0 0.0
      %464 = vmatprep.subr.mxu0 0.0
      %465 = vmatpush1.xpose.msra.mxu0 0.0
      %466 = vmatprep.subr.mxu0 0.0
      %467 = vmatpush1.xpose.msra.mxu0 0.0
      %468 = vmatprep.subr.mxu0 0.0
      %469 = vmatpush1.xpose.msra.mxu0 0.0
      %470 = vmatprep.subr.mxu0 0.0
      %471 = vmatpush1.xpose.msra.mxu0 0.0
      %472 = vmatprep.subr.mxu0 0.0
      %473 = vmatpush1.xpose.msra.mxu0 0.0
      %474 = vmatprep.subr.mxu0 %v441
      %475 = vmatpush1.xpose.msra.mxu0 %v440
      %476 = vmatprep.subr.mxu0 0.0
      %477 = vmatpush2.xpose.msra.mxu0 0.0
      %478 = vmatprep.subr.mxu0 0.0
      %479 = vmatpush2.xpose.msra.mxu0 0.0
      %480 = vmatprep.subr.mxu0 0.0
      %481 = vmatpush2.xpose.msra.mxu0 0.0
      %482 = vmatprep.subr.mxu0 0.0
      %483 = vmatpush2.xpose.msra.mxu0 0.0
      %484 = vmatprep.subr.mxu0 0.0
      %485 = vmatpush2.xpose.msra.mxu0 0.0
      %486 = vmatprep.subr.mxu0 0.0
      %487 = vmatpush2.xpose.msra.mxu0 0.0
      %488 = vmatprep.subr.mxu0 0.0
      %489 = vmatpush2.xpose.msra.mxu0 0.0
      %490 = vmatprep.subr.mxu0 0.0
      %491 = vmatpush2.xpose.msra.mxu0 0.0
      %492 = vmatprep.subr.mxu0 0.0
      %493 = vmatpush2.xpose.msra.mxu0 0.0
      %494 = vmatprep.subr.mxu0 0.0
      %495 = vmatpush2.xpose.msra.mxu0 0.0
      %496 = vmatprep.subr.mxu0 0.0
      %497 = vmatpush2.xpose.msra.mxu0 0.0
      %498 = vmatprep.subr.mxu0 0.0
      %499 = vmatpush2.xpose.msra.mxu0 0.0
      %500 = vmatprep.subr.mxu0 0.0
      %501 = vmatpush2.xpose.msra.mxu0 0.0
      %502 = vmatprep.subr.mxu0 0.0
      %503 = vmatpush2.xpose.msra.mxu0 0.0
      %504 = vmatprep.subr.mxu0 0.0
      %505 = vmatpush2.xpose.msra.mxu0 0.0
      %506 = vmatprep.subr.mxu0 0.0
      %507 = vmatpush2.xpose.msra.mxu0 0.0
      %508 = vmatprep.mubr.f32.mxu0 %v430
      %509 = vmatmul.mubr.f32.gmra.mxu0 %v429
      %v510 = vpop.f32.mrf.mxu0
      %v511 = vadd.f32 0.0, %v510
      %v512 = vpop.f32.mrf.mxu0
      %513 = vmatprep.mubr.f32.mxu0 %v432
      %514 = vmatmul.mubr.f32.gmra.mxu0 %v431
      %v515 = vpop.f32.mrf.mxu0
      %v516 = vadd.f32 0.0, %v515
      %v517 = vpop.f32.mrf.mxu0
      %518 = vdwg.mxu0
      %v519 = vadd.f32 %v442, %v511
      %v520 = vadd.f32 %v443, %v516
      %vm521 = vcmask 64512
      %522 = vst.msk [vmem:[%s379] sm:$0xff] %vm521, %v519
      %523 = vst.msk [vmem:[%s379 + $0x8] sm:$0xff] %vm521, %v520
      %v524 = vld [vmem:[%s386] sm:$0xff]
      %v525 = vld [vmem:[%s386 + $0x8] sm:$0xff]
      %v526 = vadd.s32 %v425, %v426
      %v527 = vand.u32 %v526, 65535
      %v528 = vshrl.u32 %v526, 16
      %v529 = vcvt.s32.f32 %v527
      %v530 = vcvt.s32.f32 %v528
      %531 = vadd.xlane.f32.xlu0 %v529
      %v532 = vpop.xlane.xlu0 %531
      %533 = vadd.xlane.f32.xlu0 %v530
      %v534 = vpop.xlane.xlu0 %533
      %v535 = vcvt.f32.s32 %v532
      %v536 = vcvt.f32.s32 %v534
      %v537 = vshll.u32 %v536, 16
      %v538 = vadd.s32 %v537, %v535
      %v539 = vadd.s32 %v427, %v428
      %v540 = vand.u32 %v539, 65535
      %v541 = vshrl.u32 %v539, 16
      %v542 = vcvt.s32.f32 %v540
      %v543 = vcvt.s32.f32 %v541
      %544 = vadd.xlane.f32.xlu0 %v542
      %v545 = vpop.xlane.xlu0 %544
      %546 = vadd.xlane.f32.xlu0 %v543
      %v547 = vpop.xlane.xlu0 %546
      %v548 = vcvt.f32.s32 %v545
      %v549 = vcvt.f32.s32 %v547
      %v550 = vshll.u32 %v549, 16
      %v551 = vadd.s32 %v550, %v548
      %v552 = vcvt.s32.f32 %v538
      %v553 = vcvt.s32.f32 %v551
      %v554 = vadd.f32 %v524, %v552
      %v555 = vadd.f32 %v525, %v553
      %vm556 = vcmask 7168
      %557 = vst.msk [vmem:[%s386] sm:$0xff] %vm556, %v554
      %558 = vst.msk [vmem:[%s386 + $0x8] sm:$0xff] %vm556, %v555
      %s559 = sadd.s32 %s21, %s22
      %p560 = scmp.lt.s32.totalorder %s559, 1
      %s561 = scalar_select %p560, %s559, 1
      %s562 = smul.addr %s561, 2
      %s563 = smul.addr %s562, 8
      %s564 = scalar_lea.vmem %s3, %s563
      %s565 = sadd.s32 %s21, %s22
      %p566 = scmp.lt.s32.totalorder %s565, 1
      %s567 = scalar_select %p566, %s565, 1
      %s568 = smul.addr %s567, 2
      %s569 = smul.addr %s568, 8
      %s570 = scalar_lea.vmem %s4, %s569
      // Predicated region
      $region37: #{rad_loss.2} parent=31 // pred_check
        %p571 = pneg %p157
      $region38: #{rad_loss.2} parent=31 // pred_check_branch
        %573 = sbr.rel (%p571) target = $region40
      $region39: #{rad_loss.2} parent=31 // pred_region
        %s574 = sadd.s32 %s21, %s22
      $region40: #{rad_loss.2} parent=31 // pred_fallthru
        _
      // Predicated region
      $region41: #{rad_loss.2} parent=31 // pred_check
        %p575 = pneg %p185
      $region42: #{rad_loss.2} parent=31 // pred_check_branch
        %577 = sbr.rel (%p575) target = $region44
      $region43: #{rad_loss.2} parent=31 // pred_region
        %s578 = sadd.s32 %s21, %s22
      $region44: #{rad_loss.2} parent=31 // pred_fallthru
        _
    $region32: #{rad_loss.2} parent=5 // pred_fallthru
      _
    %p579 = scmp.le.s32.totalorder 2, %s11
    // Predicated region
    $region45: #{rad_loss.2} parent=5 // pred_check
      %p580 = pneg %p579
    $region46: #{rad_loss.2} parent=5 // pred_check_branch
      %582 = sbr.rel (%p580) target = $region48
    $region47: #{rad_loss.2} parent=5 // pred_region
      %s583 = ssub.s32 %s11, 2
      // Predicated region
      $region49: #{rad_loss.2} parent=47 // pred_check
        %p584 = pneg %p163
      $region50: #{rad_loss.2} parent=47 // pred_check_branch
        %586 = sbr.rel (%p584) target = $region52
      $region51: #{rad_loss.2} parent=47 // pred_region
        %s587 = sadd.s32 %s24, %s25
        %p588 = scmp.lt.s32.totalorder %s587, 1
        %s589 = scalar_select %p588, %s587, 1
        %s590 = smul.addr %s589, 2
        %s591 = smul.addr %s590, 8
        %s592 = scalar_lea.vmem %s3, %s591
      $region52: #{rad_loss.2} parent=47 // pred_fallthru
        _
      // Predicated region
      $region53: #{rad_loss.2} parent=47 // pred_check
        %p593 = pneg %p191
      $region54: #{rad_loss.2} parent=47 // pred_check_branch
        %595 = sbr.rel (%p593) target = $region56
      $region55: #{rad_loss.2} parent=47 // pred_region
        %s596 = sadd.s32 %s24, %s25
        %p597 = scmp.lt.s32.totalorder %s596, 1
        %s598 = scalar_select %p597, %s596, 1
        %s599 = smul.addr %s598, 2
        %s600 = smul.addr %s599, 8
        %s601 = scalar_lea.vmem %s4, %s600
      $region56: #{rad_loss.2} parent=47 // pred_fallthru
        _
    $region48: #{rad_loss.2} parent=5 // pred_fallthru
      _
  $region6: #{rad_loss.2} parent=0 // loop_footer
    %s15 = sadd.s32 1, %s11
  $region7: #{rad_loss.2} parent=0 // loop_footer_branch
    %10 = sbr.rel target = $region3
  $region8: #{rad_loss.2} parent=0 // loop_exit
    _

// kernel: rad_loss.3
$region0: #{rad_loss.3}
  #allocation0 [shape = 'u32[]', space=smem, size = 0x4, offset = 0x4, fixed_abs, tag = 'smem constant byte address 0x4 - core index']
  #allocation1 [shape = 'u32[144,128]{1,0:T(1,128)}', space=vmem, size = 0x12000, scoped, tag = 'internal scratch']
  %s0 = inlined_call_operand.vmem [shape: f32[2,16,4], index: 0, kind: input, shape index: {}]
  %s1 = inlined_call_operand.vmem [shape: f32[2,16,4], index: 1, kind: input, shape index: {}]
  %s2 = inlined_call_operand.vmem [shape: f32[2,16,1], index: 2, kind: input, shape index: {}]
  %s3 = inlined_call_operand.hbm [shape: f32[1,1], index: 3, kind: output, shape index: {}]
  %s4 = sld [smem:[#allocation0]]
  $region22: #{rad_loss.3} parent=0
    _
  %s6 = ssub.s32 1, %s4
  %s7 = scalar_select 0, %s6, %s4
  $region1: #{rad_loss.3} parent=0
    #allocation2 [shape = 'u8[512]{0}', space=vmem, size = 0x400, scoped, tag = 'output window, operand 0, single buffered']
    #allocation3 [shape = 's32[1]{0}', space=sflag, size = 0x4, scoped, tag = 'scoped memory for rad_loss.3']
    %8 = vsyncpa [#allocation3], 0
    // Predicated region
    $region2: #{rad_loss.3} parent=1 // pred_check
      _
    $region3: #{rad_loss.3} parent=1 // pred_check_branch
      %10 = sbr.rel (0) target = $region5
    $region4: #{rad_loss.3} parent=1 // pred_region
      _
    $region5: #{rad_loss.3} parent=1 // pred_fallthru
      _
    // Predicated region
    $region6: #{rad_loss.3} parent=1 // pred_check
      _
    $region7: #{rad_loss.3} parent=1 // pred_check_branch
      %12 = sbr.rel (0) target = $region9
    $region8: #{rad_loss.3} parent=1 // pred_region
      _
    $region9: #{rad_loss.3} parent=1 // pred_fallthru
      _
    // Predicated region
    $region10: #{rad_loss.3} parent=1 // pred_check
      _
    $region11: #{rad_loss.3} parent=1 // pred_check_branch
      %14 = sbr.rel (0) target = $region13
    $region12: #{rad_loss.3} parent=1 // pred_region
      _
    $region13: #{rad_loss.3} parent=1 // pred_fallthru
      _
    %v15 = vld [vmem:[%s0] sm:$0xff]
    %v16 = vld [vmem:[%s0 + $0x8] sm:$0xff]
    %v17 = vld [vmem:[%s0 + $0x10] sm:$0xff]
    %v18 = vld [vmem:[%s0 + $0x18] sm:$0xff]
    %v19 = vld [vmem:[%s1] sm:$0xff]
    %v20 = vld [vmem:[%s1 + $0x8] sm:$0xff]
    %v21 = vld [vmem:[%s1 + $0x10] sm:$0xff]
    %v22 = vld [vmem:[%s1 + $0x18] sm:$0xff]
    %v23 = vld [vmem:[%s2] sm:$0xff]
    %v24 = vld [vmem:[%s2 + $0x8] sm:$0xff]
    %v25 = vld [vmem:[%s2 + $0x10] sm:$0xff]
    %v26 = vld [vmem:[%s2 + $0x18] sm:$0xff]
    %28 = vset.pattern.permute.xlu0 0
    %29 = vperm.xlu0 %28, %v23
    %v30 = vpop.permute.xlu0 %29
    %33 = vset.pattern.permute.xlu0 0
    %34 = vperm.xlu0 %33, %v24
    %v35 = vpop.permute.xlu0 %34
    %38 = vset.pattern.permute.xlu0 0
    %39 = vperm.xlu0 %38, %v25
    %v40 = vpop.permute.xlu0 %39
    %43 = vset.pattern.permute.xlu0 0
    %44 = vperm.xlu0 %43, %v26
    %v45 = vpop.permute.xlu0 %44
    %v47 = vrcp.pop %v30
    %v48 = vmul.f32 %v15, %v47
    %v49 = vrcp.pop %v35
    %v50 = vmul.f32 %v16, %v49
    %v51 = vrcp.pop %v40
    %v52 = vmul.f32 %v17, %v51
    %v53 = vrcp.pop %v45
    %v54 = vmul.f32 %v18, %v53
    %v55 = vadd.f32 %v23, 1.0
    %v56 = vadd.f32 %v24, 1.0
    %v57 = vadd.f32 %v25, 1.0
    %v58 = vadd.f32 %v26, 1.0
    %60 = vset.pattern.permute.xlu0 0
    %61 = vperm.xlu0 %60, %v55
    %v62 = vpop.permute.xlu0 %61
    %65 = vset.pattern.permute.xlu0 0
    %66 = vperm.xlu0 %65, %v56
    %v67 = vpop.permute.xlu0 %66
    %70 = vset.pattern.permute.xlu0 0
    %71 = vperm.xlu0 %70, %v57
    %v72 = vpop.permute.xlu0 %71
    %75 = vset.pattern.permute.xlu0 0
    %76 = vperm.xlu0 %75, %v58
    %v77 = vpop.permute.xlu0 %76
    %v79 = vrcp.pop %v62
    %v80 = vmul.f32 %v15, %v79
    %v81 = vrcp.pop %v67
    %v82 = vmul.f32 %v16, %v81
    %v83 = vrcp.pop %v72
    %v84 = vmul.f32 %v17, %v83
    %v85 = vrcp.pop %v77
    %v86 = vmul.f32 %v18, %v85
    %v87 = vmul.f32 %v48, %v48
    %v88 = vmul.f32 %v50, %v50
    %v89 = vmul.f32 %v52, %v52
    %v90 = vmul.f32 %v54, %v54
    %vm91 = vcmask 31744
    %v92 = vsel %vm91, %v87, 0.0
    %93 = vadd.xlane.f32.xlu0 %v92
    %v94 = vpop.xlane.xlu0 %93
    %v95 = vsel %vm91, %v88, 0.0
    %96 = vadd.xlane.f32.xlu0 %v95
    %v97 = vpop.xlane.xlu0 %96
    %v98 = vsel %vm91, %v89, 0.0
    %99 = vadd.xlane.f32.xlu0 %v98
    %v100 = vpop.xlane.xlu0 %99
    %v101 = vsel %vm91, %v90, 0.0
    %102 = vadd.xlane.f32.xlu0 %v101
    %v103 = vpop.xlane.xlu0 %102
    %v104 = vrsqrt.pop %v94
    %v105 = vmul.f32 %v94, %v104
    %vm106 = vcmp.eq.f32.partialorder %v94, inf
    %v107 = vsel %vm106, %v94, %v105
    %vm108 = vcmp.eq.f32.partialorder %v94, 0.0
    %v109 = vand.u32 %v94, 2147483648
    %v110 = vsel %vm108, %v109, %v107
    %v111 = vrsqrt.pop %v97
    %v112 = vmul.f32 %v97, %v111
    %vm113 = vcmp.eq.f32.partialorder %v97, inf
    %v114 = vsel %vm113, %v97, %v112
    %vm115 = vcmp.eq.f32.partialorder %v97, 0.0
    %v116 = vand.u32 %v97, 2147483648
    %v117 = vsel %vm115, %v116, %v114
    %v118 = vrsqrt.pop %v100
    %v119 = vmul.f32 %v100, %v118
    %vm120 = vcmp.eq.f32.partialorder %v100, inf
    %v121 = vsel %vm120, %v100, %v119
    %vm122 = vcmp.eq.f32.partialorder %v100, 0.0
    %v123 = vand.u32 %v100, 2147483648
    %v124 = vsel %vm122, %v123, %v121
    %v125 = vrsqrt.pop %v103
    %v126 = vmul.f32 %v103, %v125
    %vm127 = vcmp.eq.f32.partialorder %v103, inf
    %v128 = vsel %vm127, %v103, %v126
    %vm129 = vcmp.eq.f32.partialorder %v103, 0.0
    %v130 = vand.u32 %v103, 2147483648
    %v131 = vsel %vm129, %v130, %v128
    %v132 = vmax.f32 %v110, 1e-08
    %v133 = vmax.f32 %v117, 1e-08
    %v134 = vmax.f32 %v124, 1e-08
    %v135 = vmax.f32 %v131, 1e-08
    %v136 = vmul.f32 %v80, %v80
    %v137 = vmul.f32 %v82, %v82
    %v138 = vmul.f32 %v84, %v84
    %v139 = vmul.f32 %v86, %v86
    %v140 = vsel %vm91, %v136, 0.0
    %141 = vadd.xlane.f32.xlu0 %v140
    %v142 = vpop.xlane.xlu0 %141
    %v143 = vsel %vm91, %v137, 0.0
    %144 = vadd.xlane.f32.xlu0 %v143
    %v145 = vpop.xlane.xlu0 %144
    %v146 = vsel %vm91, %v138, 0.0
    %147 = vadd.xlane.f32.xlu0 %v146
    %v148 = vpop.xlane.xlu0 %147
    %v149 = vsel %vm91, %v139, 0.0
    %150 = vadd.xlane.f32.xlu0 %v149
    %v151 = vpop.xlane.xlu0 %150
    %v152 = vrsqrt.pop %v142
    %v153 = vmul.f32 %v142, %v152
    %vm154 = vcmp.eq.f32.partialorder %v142, inf
    %v155 = vsel %vm154, %v142, %v153
    %vm156 = vcmp.eq.f32.partialorder %v142, 0.0
    %v157 = vand.u32 %v142, 2147483648
    %v158 = vsel %vm156, %v157, %v155
    %v159 = vrsqrt.pop %v145
    %v160 = vmul.f32 %v145, %v159
    %vm161 = vcmp.eq.f32.partialorder %v145, inf
    %v162 = vsel %vm161, %v145, %v160
    %vm163 = vcmp.eq.f32.partialorder %v145, 0.0
    %v164 = vand.u32 %v145, 2147483648
    %v165 = vsel %vm163, %v164, %v162
    %v166 = vrsqrt.pop %v148
    %v167 = vmul.f32 %v148, %v166
    %vm168 = vcmp.eq.f32.partialorder %v148, inf
    %v169 = vsel %vm168, %v148, %v167
    %vm170 = vcmp.eq.f32.partialorder %v148, 0.0
    %v171 = vand.u32 %v148, 2147483648
    %v172 = vsel %vm170, %v171, %v169
    %v173 = vrsqrt.pop %v151
    %v174 = vmul.f32 %v151, %v173
    %vm175 = vcmp.eq.f32.partialorder %v151, inf
    %v176 = vsel %vm175, %v151, %v174
    %vm177 = vcmp.eq.f32.partialorder %v151, 0.0
    %v178 = vand.u32 %v151, 2147483648
    %v179 = vsel %vm177, %v178, %v176
    %v180 = vmax.f32 %v158, 1e-08
    %v181 = vmax.f32 %v165, 1e-08
    %v182 = vmax.f32 %v172, 1e-08
    %v183 = vmax.f32 %v179, 1e-08
    %v184 = vrcp.pop %v132
    %v185 = vmul.f32 %v48, %v184
    %v186 = vrcp.pop %v133
    %v187 = vmul.f32 %v50, %v186
    %v188 = vrcp.pop %v134
    %v189 = vmul.f32 %v52, %v188
    %v190 = vrcp.pop %v135
    %v191 = vmul.f32 %v54, %v190
    %v192 = vrcp.pop %v180
    %v193 = vmul.f32 %v80, %v192
    %v194 = vrcp.pop %v181
    %v195 = vmul.f32 %v82, %v194
    %v196 = vrcp.pop %v182
    %v197 = vmul.f32 %v84, %v196
    %v198 = vrcp.pop %v183
    %v199 = vmul.f32 %v86, %v198
    %v201 = vsel %vm91, %v185, 0
    %v204 = vsel %vm91, %v187, 0
    %v207 = vsel %vm91, %v193, 0
    %v210 = vsel %vm91, %v195, 0
    %212 = vmatprep.subr.mxu0 0.0
    %213 = vmatpush1.xpose.msra.mxu0 0.0
    %214 = vmatprep.subr.mxu0 0.0
    %215 = vmatpush1.xpose.msra.mxu0 0.0
    %216 = vmatprep.subr.mxu0 0.0
    %217 = vmatpush1.xpose.msra.mxu0 0.0
    %218 = vmatprep.subr.mxu0 0.0
    %219 = vmatpush1.xpose.msra.mxu0 0.0
    %220 = vmatprep.subr.mxu0 0.0
    %221 = vmatpush1.xpose.msra.mxu0 0.0
    %222 = vmatprep.subr.mxu0 0.0
    %223 = vmatpush1.xpose.msra.mxu0 0.0
    %224 = vmatprep.subr.mxu0 0.0
    %225 = vmatpush1.xpose.msra.mxu0 0.0
    %226 = vmatprep.subr.mxu0 0.0
    %227 = vmatpush1.xpose.msra.mxu0 0.0
    %228 = vmatprep.subr.mxu0 0.0
    %229 = vmatpush1.xpose.msra.mxu0 0.0
    %230 = vmatprep.subr.mxu0 0.0
    %231 = vmatpush1.xpose.msra.mxu0 0.0
    %232 = vmatprep.subr.mxu0 0.0
    %233 = vmatpush1.xpose.msra.mxu0 0.0
    %234 = vmatprep.subr.mxu0 0.0
    %235 = vmatpush1.xpose.msra.mxu0 0.0
    %236 = vmatprep.subr.mxu0 0.0
    %237 = vmatpush1.xpose.msra.mxu0 0.0
    %238 = vmatprep.subr.mxu0 0.0
    %239 = vmatpush1.xpose.msra.mxu0 0.0
    %240 = vmatprep.subr.mxu0 0.0
    %241 = vmatpush1.xpose.msra.mxu0 %v210
    %242 = vmatprep.subr.mxu0 0.0
    %243 = vmatpush1.xpose.msra.mxu0 %v207
    %244 = vmatprep.subr.mxu0 0.0
    %245 = vmatpush2.xpose.msra.mxu0 0.0
    %246 = vmatprep.subr.mxu0 0.0
    %247 = vmatpush2.xpose.msra.mxu0 0.0
    %248 = vmatprep.subr.mxu0 0.0
    %249 = vmatpush2.xpose.msra.mxu0 0.0
    %250 = vmatprep.subr.mxu0 0.0
    %251 = vmatpush2.xpose.msra.mxu0 0.0
    %252 = vmatprep.subr.mxu0 0.0
    %253 = vmatpush2.xpose.msra.mxu0 0.0
    %254 = vmatprep.subr.mxu0 0.0
    %255 = vmatpush2.xpose.msra.mxu0 0.0
    %256 = vmatprep.subr.mxu0 0.0
    %257 = vmatpush2.xpose.msra.mxu0 0.0
    %258 = vmatprep.subr.mxu0 0.0
    %259 = vmatpush2.xpose.msra.mxu0 0.0
    %260 = vmatprep.subr.mxu0 0.0
    %261 = vmatpush2.xpose.msra.mxu0 0.0
    %262 = vmatprep.subr.mxu0 0.0
    %263 = vmatpush2.xpose.msra.mxu0 0.0
    %264 = vmatprep.subr.mxu0 0.0
    %265 = vmatpush2.xpose.msra.mxu0 0.0
    %266 = vmatprep.subr.mxu0 0.0
    %267 = vmatpush2.xpose.msra.mxu0 0.0
    %268 = vmatprep.subr.mxu0 0.0
    %269 = vmatpush2.xpose.msra.mxu0 0.0
    %270 = vmatprep.subr.mxu0 0.0
    %271 = vmatpush2.xpose.msra.mxu0 0.0
    %272 = vmatprep.subr.mxu0 0.0
    %273 = vmatpush2.xpose.msra.mxu0 0.0
    %274 = vmatprep.subr.mxu0 0.0
    %275 = vmatpush2.xpose.msra.mxu0 0.0
    %276 = vmatprep.mubr.f32.mxu0 0.0
    %277 = vmatmul.mubr.f32.gmra.mxu0 %v201
    %v278 = vpop.f32.mrf.mxu0
    %v279 = vadd.f32 0.0, %v278
    %v280 = vpop.f32.mrf.mxu0
    %281 = vmatprep.mubr.f32.mxu0 0.0
    %282 = vmatmul.mubr.f32.gmra.mxu0 %v204
    %v283 = vpop.f32.mrf.mxu0
    %v284 = vadd.f32 0.0, %v283
    %v285 = vpop.f32.mrf.mxu0
    %286 = vdwg.mxu0
    %v288 = vsel %vm91, %v189, 0
    %v291 = vsel %vm91, %v191, 0
    %v294 = vsel %vm91, %v197, 0
    %v297 = vsel %vm91, %v199, 0
    %299 = vmatprep.subr.mxu0 0.0
    %300 = vmatpush1.xpose.msra.mxu0 0.0
    %301 = vmatprep.subr.mxu0 0.0
    %302 = vmatpush1.xpose.msra.mxu0 0.0
    %303 = vmatprep.subr.mxu0 0.0
    %304 = vmatpush1.xpose.msra.mxu0 0.0
    %305 = vmatprep.subr.mxu0 0.0
    %306 = vmatpush1.xpose.msra.mxu0 0.0
    %307 = vmatprep.subr.mxu0 0.0
    %308 = vmatpush1.xpose.msra.mxu0 0.0
    %309 = vmatprep.subr.mxu0 0.0
    %310 = vmatpush1.xpose.msra.mxu0 0.0
    %311 = vmatprep.subr.mxu0 0.0
    %312 = vmatpush1.xpose.msra.mxu0 0.0
    %313 = vmatprep.subr.mxu0 0.0
    %314 = vmatpush1.xpose.msra.mxu0 0.0
    %315 = vmatprep.subr.mxu0 0.0
    %316 = vmatpush1.xpose.msra.mxu0 0.0
    %317 = vmatprep.subr.mxu0 0.0
    %318 = vmatpush1.xpose.msra.mxu0 0.0
    %319 = vmatprep.subr.mxu0 0.0
    %320 = vmatpush1.xpose.msra.mxu0 0.0
    %321 = vmatprep.subr.mxu0 0.0
    %322 = vmatpush1.xpose.msra.mxu0 0.0
    %323 = vmatprep.subr.mxu0 0.0
    %324 = vmatpush1.xpose.msra.mxu0 0.0
    %325 = vmatprep.subr.mxu0 0.0
    %326 = vmatpush1.xpose.msra.mxu0 0.0
    %327 = vmatprep.subr.mxu0 0.0
    %328 = vmatpush1.xpose.msra.mxu0 %v297
    %329 = vmatprep.subr.mxu0 0.0
    %330 = vmatpush1.xpose.msra.mxu0 %v294
    %331 = vmatprep.subr.mxu0 0.0
    %332 = vmatpush2.xpose.msra.mxu0 0.0
    %333 = vmatprep.subr.mxu0 0.0
    %334 = vmatpush2.xpose.msra.mxu0 0.0
    %335 = vmatprep.subr.mxu0 0.0
    %336 = vmatpush2.xpose.msra.mxu0 0.0
    %337 = vmatprep.subr.mxu0 0.0
    %338 = vmatpush2.xpose.msra.mxu0 0.0
    %339 = vmatprep.subr.mxu0 0.0
    %340 = vmatpush2.xpose.msra.mxu0 0.0
    %341 = vmatprep.subr.mxu0 0.0
    %342 = vmatpush2.xpose.msra.mxu0 0.0
    %343 = vmatprep.subr.mxu0 0.0
    %344 = vmatpush2.xpose.msra.mxu0 0.0
    %345 = vmatprep.subr.mxu0 0.0
    %346 = vmatpush2.xpose.msra.mxu0 0.0
    %347 = vmatprep.subr.mxu0 0.0
    %348 = vmatpush2.xpose.msra.mxu0 0.0
    %349 = vmatprep.subr.mxu0 0.0
    %350 = vmatpush2.xpose.msra.mxu0 0.0
    %351 = vmatprep.subr.mxu0 0.0
    %352 = vmatpush2.xpose.msra.mxu0 0.0
    %353 = vmatprep.subr.mxu0 0.0
    %354 = vmatpush2.xpose.msra.mxu0 0.0
    %355 = vmatprep.subr.mxu0 0.0
    %356 = vmatpush2.xpose.msra.mxu0 0.0
    %357 = vmatprep.subr.mxu0 0.0
    %358 = vmatpush2.xpose.msra.mxu0 0.0
    %359 = vmatprep.subr.mxu0 0.0
    %360 = vmatpush2.xpose.msra.mxu0 0.0
    %361 = vmatprep.subr.mxu0 0.0
    %362 = vmatpush2.xpose.msra.mxu0 0.0
    %363 = vmatprep.mubr.f32.mxu0 0.0
    %364 = vmatmul.mubr.f32.gmra.mxu0 %v288
    %v365 = vpop.f32.mrf.mxu0
    %v366 = vadd.f32 0.0, %v365
    %v367 = vpop.f32.mrf.mxu0
    %368 = vmatprep.mubr.f32.mxu0 0.0
    %369 = vmatmul.mubr.f32.gmra.mxu0 %v291
    %v370 = vpop.f32.mrf.mxu0
    %v371 = vadd.f32 0.0, %v370
    %v372 = vpop.f32.mrf.mxu0
    %373 = vdwg.mxu0
    %v374 = vmul.f32 %v19, %v47
    %v375 = vmul.f32 %v20, %v49
    %v376 = vmul.f32 %v21, %v51
    %v377 = vmul.f32 %v22, %v53
    %v378 = vmul.f32 %v19, %v79
    %v379 = vmul.f32 %v20, %v81
    %v380 = vmul.f32 %v21, %v83
    %v381 = vmul.f32 %v22, %v85
    %v382 = vmul.f32 %v374, %v374
    %v383 = vmul.f32 %v375, %v375
    %v384 = vmul.f32 %v376, %v376
    %v385 = vmul.f32 %v377, %v377
    %v386 = vsel %vm91, %v382, 0.0
    %387 = vadd.xlane.f32.xlu0 %v386
    %v388 = vpop.xlane.xlu0 %387
    %v389 = vsel %vm91, %v383, 0.0
    %390 = vadd.xlane.f32.xlu0 %v389
    %v391 = vpop.xlane.xlu0 %390
    %v392 = vsel %vm91, %v384, 0.0
    %393 = vadd.xlane.f32.xlu0 %v392
    %v394 = vpop.xlane.xlu0 %393
    %v395 = vsel %vm91, %v385, 0.0
    %396 = vadd.xlane.f32.xlu0 %v395
    %v397 = vpop.xlane.xlu0 %396
    %v398 = vrsqrt.pop %v388
    %v399 = vmul.f32 %v388, %v398
    %vm400 = vcmp.eq.f32.partialorder %v388, inf
    %v401 = vsel %vm400, %v388, %v399
    %vm402 = vcmp.eq.f32.partialorder %v388, 0.0
    %v403 = vand.u32 %v388, 2147483648
    %v404 = vsel %vm402, %v403, %v401
    %v405 = vrsqrt.pop %v391
    %v406 = vmul.f32 %v391, %v405
    %vm407 = vcmp.eq.f32.partialorder %v391, inf
    %v408 = vsel %vm407, %v391, %v406
    %vm409 = vcmp.eq.f32.partialorder %v391, 0.0
    %v410 = vand.u32 %v391, 2147483648
    %v411 = vsel %vm409, %v410, %v408
    %v412 = vrsqrt.pop %v394
    %v413 = vmul.f32 %v394, %v412
    %vm414 = vcmp.eq.f32.partialorder %v394, inf
    %v415 = vsel %vm414, %v394, %v413
    %vm416 = vcmp.eq.f32.partialorder %v394, 0.0
    %v417 = vand.u32 %v394, 2147483648
    %v418 = vsel %vm416, %v417, %v415
    %v419 = vrsqrt.pop %v397
    %v420 = vmul.f32 %v397, %v419
    %vm421 = vcmp.eq.f32.partialorder %v397, inf
    %v422 = vsel %vm421, %v397, %v420
    %vm423 = vcmp.eq.f32.partialorder %v397, 0.0
    %v424 = vand.u32 %v397, 2147483648
    %v425 = vsel %vm423, %v424, %v422
    %v426 = vmax.f32 %v404, 1e-08
    %v427 = vmax.f32 %v411, 1e-08
    %v428 = vmax.f32 %v418, 1e-08
    %v429 = vmax.f32 %v425, 1e-08
    %v430 = vmul.f32 %v378, %v378
    %v431 = vmul.f32 %v379, %v379
    %v432 = vmul.f32 %v380, %v380
    %v433 = vmul.f32 %v381, %v381
    %v434 = vsel %vm91, %v430, 0.0
    %435 = vadd.xlane.f32.xlu0 %v434
    %v436 = vpop.xlane.xlu0 %435
    %v437 = vsel %vm91, %v431, 0.0
    %438 = vadd.xlane.f32.xlu0 %v437
    %v439 = vpop.xlane.xlu0 %438
    %v440 = vsel %vm91, %v432, 0.0
    %441 = vadd.xlane.f32.xlu0 %v440
    %v442 = vpop.xlane.xlu0 %441
    %v443 = vsel %vm91, %v433, 0.0
    %444 = vadd.xlane.f32.xlu0 %v443
    %v445 = vpop.xlane.xlu0 %444
    %v446 = vrsqrt.pop %v436
    %v447 = vmul.f32 %v436, %v446
    %vm448 = vcmp.eq.f32.partialorder %v436, inf
    %v449 = vsel %vm448, %v436, %v447
    %vm450 = vcmp.eq.f32.partialorder %v436, 0.0
    %v451 = vand.u32 %v436, 2147483648
    %v452 = vsel %vm450, %v451, %v449
    %v453 = vrsqrt.pop %v439
    %v454 = vmul.f32 %v439, %v453
    %vm455 = vcmp.eq.f32.partialorder %v439, inf
    %v456 = vsel %vm455, %v439, %v454
    %vm457 = vcmp.eq.f32.partialorder %v439, 0.0
    %v458 = vand.u32 %v439, 2147483648
    %v459 = vsel %vm457, %v458, %v456
    %v460 = vrsqrt.pop %v442
    %v461 = vmul.f32 %v442, %v460
    %vm462 = vcmp.eq.f32.partialorder %v442, inf
    %v463 = vsel %vm462, %v442, %v461
    %vm464 = vcmp.eq.f32.partialorder %v442, 0.0
    %v465 = vand.u32 %v442, 2147483648
    %v466 = vsel %vm464, %v465, %v463
    %v467 = vrsqrt.pop %v445
    %v468 = vmul.f32 %v445, %v467
    %vm469 = vcmp.eq.f32.partialorder %v445, inf
    %v470 = vsel %vm469, %v445, %v468
    %vm471 = vcmp.eq.f32.partialorder %v445, 0.0
    %v472 = vand.u32 %v445, 2147483648
    %v473 = vsel %vm471, %v472, %v470
    %v474 = vmax.f32 %v452, 1e-08
    %v475 = vmax.f32 %v459, 1e-08
    %v476 = vmax.f32 %v466, 1e-08
    %v477 = vmax.f32 %v473, 1e-08
    %v478 = vrcp.pop %v426
    %v479 = vmul.f32 %v374, %v478
    %v480 = vrcp.pop %v427
    %v481 = vmul.f32 %v375, %v480
    %v482 = vrcp.pop %v428
    %v483 = vmul.f32 %v376, %v482
    %v484 = vrcp.pop %v429
    %v485 = vmul.f32 %v377, %v484
    %v486 = vrcp.pop %v474
    %v487 = vmul.f32 %v378, %v486
    %v488 = vrcp.pop %v475
    %v489 = vmul.f32 %v379, %v488
    %v490 = vrcp.pop %v476
    %v491 = vmul.f32 %v380, %v490
    %v492 = vrcp.pop %v477
    %v493 = vmul.f32 %v381, %v492
    %v495 = vsel %vm91, %v479, 0
    %v498 = vsel %vm91, %v481, 0
    %v501 = vsel %vm91, %v487, 0
    %v504 = vsel %vm91, %v489, 0
    %506 = vmatprep.subr.mxu0 0.0
    %507 = vmatpush1.xpose.msra.mxu0 0.0
    %508 = vmatprep.subr.mxu0 0.0
    %509 = vmatpush1.xpose.msra.mxu0 0.0
    %510 = vmatprep.subr.mxu0 0.0
    %511 = vmatpush1.xpose.msra.mxu0 0.0
    %512 = vmatprep.subr.mxu0 0.0
    %513 = vmatpush1.xpose.msra.mxu0 0.0
    %514 = vmatprep.subr.mxu0 0.0
    %515 = vmatpush1.xpose.msra.mxu0 0.0
    %516 = vmatprep.subr.mxu0 0.0
    %517 = vmatpush1.xpose.msra.mxu0 0.0
    %518 = vmatprep.subr.mxu0 0.0
    %519 = vmatpush1.xpose.msra.mxu0 0.0
    %520 = vmatprep.subr.mxu0 0.0
    %521 = vmatpush1.xpose.msra.mxu0 0.0
    %522 = vmatprep.subr.mxu0 0.0
    %523 = vmatpush1.xpose.msra.mxu0 0.0
    %524 = vmatprep.subr.mxu0 0.0
    %525 = vmatpush1.xpose.msra.mxu0 0.0
    %526 = vmatprep.subr.mxu0 0.0
    %527 = vmatpush1.xpose.msra.mxu0 0.0
    %528 = vmatprep.subr.mxu0 0.0
    %529 = vmatpush1.xpose.msra.mxu0 0.0
    %530 = vmatprep.subr.mxu0 0.0
    %531 = vmatpush1.xpose.msra.mxu0 0.0
    %532 = vmatprep.subr.mxu0 0.0
    %533 = vmatpush1.xpose.msra.mxu0 0.0
    %534 = vmatprep.subr.mxu0 0.0
    %535 = vmatpush1.xpose.msra.mxu0 %v504
    %536 = vmatprep.subr.mxu0 0.0
    %537 = vmatpush1.xpose.msra.mxu0 %v501
    %538 = vmatprep.subr.mxu0 0.0
    %539 = vmatpush2.xpose.msra.mxu0 0.0
    %540 = vmatprep.subr.mxu0 0.0
    %541 = vmatpush2.xpose.msra.mxu0 0.0
    %542 = vmatprep.subr.mxu0 0.0
    %543 = vmatpush2.xpose.msra.mxu0 0.0
    %544 = vmatprep.subr.mxu0 0.0
    %545 = vmatpush2.xpose.msra.mxu0 0.0
    %546 = vmatprep.subr.mxu0 0.0
    %547 = vmatpush2.xpose.msra.mxu0 0.0
    %548 = vmatprep.subr.mxu0 0.0
    %549 = vmatpush2.xpose.msra.mxu0 0.0
    %550 = vmatprep.subr.mxu0 0.0
    %551 = vmatpush2.xpose.msra.mxu0 0.0
    %552 = vmatprep.subr.mxu0 0.0
    %553 = vmatpush2.xpose.msra.mxu0 0.0
    %554 = vmatprep.subr.mxu0 0.0
    %555 = vmatpush2.xpose.msra.mxu0 0.0
    %556 = vmatprep.subr.mxu0 0.0
    %557 = vmatpush2.xpose.msra.mxu0 0.0
    %558 = vmatprep.subr.mxu0 0.0
    %559 = vmatpush2.xpose.msra.mxu0 0.0
    %560 = vmatprep.subr.mxu0 0.0
    %561 = vmatpush2.xpose.msra.mxu0 0.0
    %562 = vmatprep.subr.mxu0 0.0
    %563 = vmatpush2.xpose.msra.mxu0 0.0
    %564 = vmatprep.subr.mxu0 0.0
    %565 = vmatpush2.xpose.msra.mxu0 0.0
    %566 = vmatprep.subr.mxu0 0.0
    %567 = vmatpush2.xpose.msra.mxu0 0.0
    %568 = vmatprep.subr.mxu0 0.0
    %569 = vmatpush2.xpose.msra.mxu0 0.0
    %570 = vmatprep.mubr.f32.mxu0 0.0
    %571 = vmatmul.mubr.f32.gmra.mxu0 %v495
    %v572 = vpop.f32.mrf.mxu0
    %v573 = vadd.f32 0.0, %v572
    %v574 = vpop.f32.mrf.mxu0
    %575 = vmatprep.mubr.f32.mxu0 0.0
    %576 = vmatmul.mubr.f32.gmra.mxu0 %v498
    %v577 = vpop.f32.mrf.mxu0
    %v578 = vadd.f32 0.0, %v577
    %v579 = vpop.f32.mrf.mxu0
    %580 = vdwg.mxu0
    %v582 = vsel %vm91, %v483, 0
    %v585 = vsel %vm91, %v485, 0
    %v588 = vsel %vm91, %v491, 0
    %v591 = vsel %vm91, %v493, 0
    %593 = vmatprep.subr.mxu0 0.0
    %594 = vmatpush1.xpose.msra.mxu0 0.0
    %595 = vmatprep.subr.mxu0 0.0
    %596 = vmatpush1.xpose.msra.mxu0 0.0
    %597 = vmatprep.subr.mxu0 0.0
    %598 = vmatpush1.xpose.msra.mxu0 0.0
    %599 = vmatprep.subr.mxu0 0.0
    %600 = vmatpush1.xpose.msra.mxu0 0.0
    %601 = vmatprep.subr.mxu0 0.0
    %602 = vmatpush1.xpose.msra.mxu0 0.0
    %603 = vmatprep.subr.mxu0 0.0
    %604 = vmatpush1.xpose.msra.mxu0 0.0
    %605 = vmatprep.subr.mxu0 0.0
    %606 = vmatpush1.xpose.msra.mxu0 0.0
    %607 = vmatprep.subr.mxu0 0.0
    %608 = vmatpush1.xpose.msra.mxu0 0.0
    %609 = vmatprep.subr.mxu0 0.0
    %610 = vmatpush1.xpose.msra.mxu0 0.0
    %611 = vmatprep.subr.mxu0 0.0
    %612 = vmatpush1.xpose.msra.mxu0 0.0
    %613 = vmatprep.subr.mxu0 0.0
    %614 = vmatpush1.xpose.msra.mxu0 0.0
    %615 = vmatprep.subr.mxu0 0.0
    %616 = vmatpush1.xpose.msra.mxu0 0.0
    %617 = vmatprep.subr.mxu0 0.0
    %618 = vmatpush1.xpose.msra.mxu0 0.0
    %619 = vmatprep.subr.mxu0 0.0
    %620 = vmatpush1.xpose.msra.mxu0 0.0
    %621 = vmatprep.subr.mxu0 0.0
    %622 = vmatpush1.xpose.msra.mxu0 %v591
    %623 = vmatprep.subr.mxu0 0.0
    %624 = vmatpush1.xpose.msra.mxu0 %v588
    %625 = vmatprep.subr.mxu0 0.0
    %626 = vmatpush2.xpose.msra.mxu0 0.0
    %627 = vmatprep.subr.mxu0 0.0
    %628 = vmatpush2.xpose.msra.mxu0 0.0
    %629 = vmatprep.subr.mxu0 0.0
    %630 = vmatpush2.xpose.msra.mxu0 0.0
    %631 = vmatprep.subr.mxu0 0.0
    %632 = vmatpush2.xpose.msra.mxu0 0.0
    %633 = vmatprep.subr.mxu0 0.0
    %634 = vmatpush2.xpose.msra.mxu0 0.0
    %635 = vmatprep.subr.mxu0 0.0
    %636 = vmatpush2.xpose.msra.mxu0 0.0
    %637 = vmatprep.subr.mxu0 0.0
    %638 = vmatpush2.xpose.msra.mxu0 0.0
    %639 = vmatprep.subr.mxu0 0.0
    %640 = vmatpush2.xpose.msra.mxu0 0.0
    %641 = vmatprep.subr.mxu0 0.0
    %642 = vmatpush2.xpose.msra.mxu0 0.0
    %643 = vmatprep.subr.mxu0 0.0
    %644 = vmatpush2.xpose.msra.mxu0 0.0
    %645 = vmatprep.subr.mxu0 0.0
    %646 = vmatpush2.xpose.msra.mxu0 0.0
    %647 = vmatprep.subr.mxu0 0.0
    %648 = vmatpush2.xpose.msra.mxu0 0.0
    %649 = vmatprep.subr.mxu0 0.0
    %650 = vmatpush2.xpose.msra.mxu0 0.0
    %651 = vmatprep.subr.mxu0 0.0
    %652 = vmatpush2.xpose.msra.mxu0 0.0
    %653 = vmatprep.subr.mxu0 0.0
    %654 = vmatpush2.xpose.msra.mxu0 0.0
    %655 = vmatprep.subr.mxu0 0.0
    %656 = vmatpush2.xpose.msra.mxu0 0.0
    %657 = vmatprep.mubr.f32.mxu0 0.0
    %658 = vmatmul.mubr.f32.gmra.mxu0 %v582
    %v659 = vpop.f32.mrf.mxu0
    %v660 = vadd.f32 0.0, %v659
    %v661 = vpop.f32.mrf.mxu0
    %662 = vmatprep.mubr.f32.mxu0 0.0
    %663 = vmatmul.mubr.f32.gmra.mxu0 %v585
    %v664 = vpop.f32.mrf.mxu0
    %v665 = vadd.f32 0.0, %v664
    %v666 = vpop.f32.mrf.mxu0
    %667 = vdwg.mxu0
    %v668 = vsub.f32 %v279, %v573
    %v669 = vsub.f32 %v284, %v578
    %v670 = vsub.f32 %v366, %v660
    %v671 = vsub.f32 %v371, %v665
    %v672 = vmul.f32 %v668, %v668
    %v673 = vmul.f32 %v669, %v669
    %v674 = vmul.f32 %v670, %v670
    %v675 = vmul.f32 %v671, %v671
    %vm676 = vcmask 130048
    %v677 = vsel %vm676, %v672, 0.0
    %v678 = vsel %vm676, %v674, 0.0
    %v679 = vadd.f32 %v677, %v678
    %v680 = vsel %vm676, %v673, 0.0
    %v681 = vsel %vm676, %v675, 0.0
    %v682 = vadd.f32 %v680, %v681
    %v683 = vrcp.pop 2.0
    %v684 = vmul.f32 %v679, %v683
    %v685 = vmul.f32 %v682, %v683
    %v686 = vlaneseq
    %v687 = vshrl.u32 %v686, 7
    %v688 = vadd.s32 %v687, 8
    %v689 = vlaneseq
    %v690 = vand.u32 %v689, 127
    %vm691 = vcmp.lt.s32.totalorder %v687, %v690
    %vm692 = vcmp.lt.s32.totalorder %v688, %v690
    %vm693 = vcmp.lt.s32.totalorder %v690, 9
    %vm694 = vmand %vm691, %vm693
    %vm695 = vmand %vm692, %vm693
    %vm696 = vcmp.ne.f32.partialorder %v684, %v684
    %vm697 = vcmp.ne.f32.partialorder %v685, %v685
    %vm698 = vmxor %vm696, 1
    %vm699 = vmxor %vm697, 1
    %vm700 = vmand %vm694, %vm698
    %vm701 = vmand %vm695, %vm699
    %v702 = vsel %vm700, %v684, 0.0
    %v703 = vsel %vm701, %v685, 0.0
    %v704 = vsel %vm676, %v702, 0.0
    %v705 = vsel %vm676, %v703, 0.0
    %v706 = vadd.f32 %v704, %v705
    %707 = vadd.xlane.f32.xlu0 %v706
    %v708 = vpop.xlane.xlu0 %707
    %v709 = vrot.slane %v708, 4
    %v710 = vadd.f32 %v708, %v709
    %v711 = vrot.slane %v710, 2
    %v712 = vadd.f32 %v710, %v711
    %v713 = vrot.slane %v712, 1
    %v714 = vadd.f32 %v712, %v713
    %s715 = vtos %v714
    %v716 = vstv %s715
    %vm717 = vcmask 0
    %718 = vst.msk [vmem:[#allocation2] sm:$0x1] %vm717, %v716
    // Predicated region
    $region14: #{rad_loss.3} parent=1 // pred_check
      _
    $region15: #{rad_loss.3} parent=1 // pred_check_branch
      %720 = sbr.rel (0) target = $region17
    $region16: #{rad_loss.3} parent=1 // pred_region
      %s722 = ssub.s32 16, 16
      %723 = vsyncadd [#allocation3], %s722
      %s725 = sshll.u32 [#allocation2], 4
      %s726 = int_to_ptr.vmem [resolvable:$true] %s725
      %728 = dma.vmem_to_hbm [thread:$0]  %s726, 16, %s3, [#allocation3]
    $region17: #{rad_loss.3} parent=1 // pred_fallthru
      _
    // Predicated region
    $region18: #{rad_loss.3} parent=1 // pred_check
      _
    $region19: #{rad_loss.3} parent=1 // pred_check_branch
      %730 = sbr.rel (0) target = $region21
    $region20: #{rad_loss.3} parent=1 // pred_region
      %731 = dma.done [#allocation3], 16
    $region21: #{rad_loss.3} parent=1 // pred_fallthru
      _
    %732 = vsyncpa [#allocation3], 1

</llo_original>
